<compile_context>
chip_gen: v6e
topology: v6e:2x2x1
jax: 0.10.0
libtpu: 0.0.40
codegen_flags: <defaults>
</compile_context>

<pallas_src>
import jax
import jax.numpy as jnp
from jax.experimental import pallas as pl
from jax.experimental.pallas import tpu as pltpu

D_IN_RAW = 28 * 28      # 784
D_IN = 896              # 7 * 128, zero-padded contraction dim for fc1
D_H1, D_H2, D_H3 = 512, 256, 128
D_OUT_RAW = 10
D_OUT = 128             # lane-dense padded logits, sliced to 10 in the wrapper

TM_MAX = 256            # batch tile: full MXU row dim on v6e/v7x


def _round_up(n, m):
    return (n + m - 1) // m * m


def _mlp_kernel(x_ref,
                w1_ref, b1_ref,
                w2_ref, b2_ref,
                w3_ref, b3_ref,
                w4_ref, b4_ref,
                o_ref):
    """Fused 4-layer MLP forward for one (TM, D_IN) batch tile.

    bf16 weights/activations into the MXU, f32 accumulation, f32 epilogues.
    """
    x = x_ref[...]                                                    # (TM, 896) bf16

    h = jnp.dot(x, w1_ref[...], preferred_element_type=jnp.float32)
    h = jnp.maximum(h + b1_ref[...], 0.0).astype(jnp.bfloat16)        # (TM, 512)

    h = jnp.dot(h, w2_ref[...], preferred_element_type=jnp.float32)
    h = jnp.maximum(h + b2_ref[...], 0.0).astype(jnp.bfloat16)        # (TM, 256)

    h = jnp.dot(h, w3_ref[...], preferred_element_type=jnp.float32)
    h = jnp.maximum(h + b3_ref[...], 0.0).astype(jnp.bfloat16)        # (TM, 128)

    h = jnp.dot(h, w4_ref[...], preferred_element_type=jnp.float32)
    o_ref[...] = (h + b4_ref[...]).astype(o_ref.dtype)                # (TM, 128)


def pack_params(params):
    """One-time parameter prep (call once, reuse across forward calls).

    Weights -> bf16 (half the HBM streaming), fc1 rows zero-padded 784->896,
    fc4 cols / bias zero-padded 10->128.  Biases stay f32 for f32 epilogues.
    """
    (w1, b1), (w2, b2), (w3, b3), (w4, b4) = params
    w1p = jnp.zeros((D_IN, D_H1), jnp.bfloat16).at[:D_IN_RAW, :].set(
        w1.astype(jnp.bfloat16))
    w4p = jnp.zeros((D_H3, D_OUT), jnp.bfloat16).at[:, :D_OUT_RAW].set(
        w4.astype(jnp.bfloat16))
    b4p = jnp.zeros((1, D_OUT), jnp.float32).at[:, :D_OUT_RAW].set(
        b4.astype(jnp.float32))
    return (w1p, b1.astype(jnp.float32),
            w2.astype(jnp.bfloat16), b2.astype(jnp.float32),
            w3.astype(jnp.bfloat16), b3.astype(jnp.float32),
            w4p, b4p)


@jax.jit
def simple_net_forward(x, packed_params):
    """x: (B, 1, 28, 28) float. Returns logits (B, 10) float32."""
    w1, b1, w2, b2, w3, b3, w4, b4 = packed_params
    B = x.shape[0]
    x2d = x.reshape(B, -1).astype(jnp.bfloat16)                       # (B, 784)

    # Batch tile: multiple of 16 (bf16 sublane tile), capped at TM_MAX.
    tm = min(TM_MAX, _round_up(B, 16))
    Bp = _round_up(B, tm)
    # Pad batch to a tile multiple and the contraction dim to 896 lanes.
    x2d = jnp.pad(x2d, ((0, Bp - B), (0, D_IN - D_IN_RAW)))           # (Bp, 896)

    # Weights/biases: same block for every grid step -> stay VMEM-resident.
    resident = lambda a: pl.BlockSpec(a.shape, lambda i: (0, 0))

    grid_m = Bp // tm
    # Advisory cost hint for XLA's scheduler around the custom call.
    flops = 2 * Bp * (D_IN * D_H1 + D_H1 * D_H2 + D_H2 * D_H3 + D_H3 * D_OUT)
    bytes_accessed = (
        x2d.size * 2 + Bp * D_OUT * 4
        + 2 * (w1.size + w2.size + w3.size + w4.size)
        + 4 * (b1.size + b2.size + b3.size + b4.size))

    out = pl.pallas_call(
        _mlp_kernel,
        out_shape=jax.ShapeDtypeStruct((Bp, D_OUT), jnp.float32),
        grid=(grid_m,),
        in_specs=[pl.BlockSpec((tm, D_IN), lambda i: (i, 0)),
                  resident(w1), resident(b1),
                  resident(w2), resident(b2),
                  resident(w3), resident(b3),
                  resident(w4), resident(b4)],
        out_specs=pl.BlockSpec((tm, D_OUT), lambda i: (i, 0)),
        compiler_params=pltpu.CompilerParams(
            dimension_semantics=("parallel",)),
        cost_estimate=pl.CostEstimate(
            flops=flops, transcendentals=0, bytes_accessed=bytes_accessed),
    )(x2d, w1, b1, w2, b2, w3, b3, w4, b4)

    return out[:B, :D_OUT_RAW]


def init_params(key):
    """Deterministic init matching nn.Linear shapes (weights stored (in, out))."""
    dims = [(28 * 28, 512), (512, 256), (256, 128), (128, 10)]
    params = []
    for fan_in, fan_out in dims:
        kw, kb, key = jax.random.split(key, 3)
        bound = 1.0 / jnp.sqrt(fan_in)
        w = jax.random.uniform(kw, (fan_in, fan_out), jnp.float32, -bound, bound)
        b = jax.random.uniform(kb, (1, fan_out), jnp.float32, -bound, bound)
        params.append((w, b))
    return params


def _reference_forward(x, params):
    """Pure-f32 reference (torch semantics)."""
    h = x.reshape(x.shape[0], -1)
    (w1, b1), (w2, b2), (w3, b3), (w4, b4) = params
    h = jnp.maximum(h @ w1 + b1, 0.0)
    h = jnp.maximum(h @ w2 + b2, 0.0)
    h = jnp.maximum(h @ w3 + b3, 0.0)
    return h @ w4 + b4


def _reference_forward_mixed(x, params):
    """Same mixed precision recipe as the kernel, for a tight numerical check."""
    h = x.reshape(x.shape[0], -1).astype(jnp.bfloat16)
    for idx, (w, b) in enumerate(params):
        h = jnp.dot(h, w.astype(jnp.bfloat16),
                    preferred_element_type=jnp.float32) + b.astype(jnp.float32)
        if idx < 3:
            h = jnp.maximum(h, 0.0).astype(jnp.bfloat16)
    return h


if __name__ == "__main__":
    key = jax.random.PRNGKey(0)
    kx, kp = jax.random.split(key)

    B = 8
    x = jax.random.normal(kx, (B, 1, 28, 28), jnp.float32)  # NCHW, like MNIST
    params = init_params(kp)
    packed = pack_params(params)  # one-time bf16 cast + lane padding

    logits = jax.block_until_ready(simple_net_forward(x, packed))
    assert logits.shape == (B, 10)

    # Tight check against a reference using the identical bf16/f32 recipe.
    ref_mixed = _reference_forward_mixed(x, params)
    assert jnp.allclose(logits, ref_mixed, atol=2e-3, rtol=2e-3), (
        float(jnp.max(jnp.abs(logits - ref_mixed))))

    # Loose sanity check against the full-f32 torch-semantics reference.
    ref_f32 = _reference_forward(x, params)
    assert jnp.allclose(logits, ref_f32, atol=5e-2, rtol=5e-2), (
        float(jnp.max(jnp.abs(logits - ref_f32))))

    print("KERNEL_OK")
</pallas_src>

<mosaic_0001>
module attributes {stable_mosaic.version = 11 : i64} {
  func.func @_mlp_kernel(%arg0: i32, %arg1: memref<16x896xbf16, #tpu.memory_space<vmem>>, %arg2: memref<896x512xbf16, #tpu.memory_space<vmem>>, %arg3: memref<1x512xf32, #tpu.memory_space<vmem>>, %arg4: memref<512x256xbf16, #tpu.memory_space<vmem>>, %arg5: memref<1x256xf32, #tpu.memory_space<vmem>>, %arg6: memref<256x128xbf16, #tpu.memory_space<vmem>>, %arg7: memref<1x128xf32, #tpu.memory_space<vmem>>, %arg8: memref<128x128xbf16, #tpu.memory_space<vmem>>, %arg9: memref<1x128xf32, #tpu.memory_space<vmem>>, %arg10: memref<16x128xf32, #tpu.memory_space<vmem>>) attributes {dimension_semantics = [#tpu.dimension_semantics<parallel>], iteration_bounds = array<i64: 1>, scalar_prefetch = 0 : i64, scratch_operands = 0 : i64, tpu.core_type = #tpu.core_type<tc>, window_params = [{transform_indices = @transform_0, window_bounds = array<i64: 16, 896>}, {pipeline_mode = #tpu.pipeline_mode<synchronous>, transform_indices = @transform_1, window_bounds = array<i64: 896, 512>}, {pipeline_mode = #tpu.pipeline_mode<synchronous>, transform_indices = @transform_2, window_bounds = array<i64: 1, 512>}, {pipeline_mode = #tpu.pipeline_mode<synchronous>, transform_indices = @transform_3, window_bounds = array<i64: 512, 256>}, {pipeline_mode = #tpu.pipeline_mode<synchronous>, transform_indices = @transform_4, window_bounds = array<i64: 1, 256>}, {pipeline_mode = #tpu.pipeline_mode<synchronous>, transform_indices = @transform_5, window_bounds = array<i64: 256, 128>}, {pipeline_mode = #tpu.pipeline_mode<synchronous>, transform_indices = @transform_6, window_bounds = array<i64: 1, 128>}, {pipeline_mode = #tpu.pipeline_mode<synchronous>, transform_indices = @transform_7, window_bounds = array<i64: 128, 128>}, {pipeline_mode = #tpu.pipeline_mode<synchronous>, transform_indices = @transform_8, window_bounds = array<i64: 1, 128>}, {transform_indices = @transform_9, window_bounds = array<i64: 16, 128>}]} {
    %c0 = arith.constant 0 : index
    %c0_0 = arith.constant 0 : index
    %0 = vector.load %arg1[%c0, %c0_0] : memref<16x896xbf16, #tpu.memory_space<vmem>>, vector<16x896xbf16>
    %c0_1 = arith.constant 0 : index
    %c0_2 = arith.constant 0 : index
    %1 = vector.load %arg2[%c0_1, %c0_2] : memref<896x512xbf16, #tpu.memory_space<vmem>>, vector<896x512xbf16>
    %cst = arith.constant dense<0.000000e+00> : vector<16x512xf32>
    %2 = tpu.matmul %0, %1, %cst {dimension_numbers = #tpu.dot_dimension_numbers<[1], [0], [0], [1], [0, 0, 1, 1], [], []>} : vector<16x896xbf16>, vector<896x512xbf16>, vector<16x512xf32> -> vector<16x512xf32>
    %c0_3 = arith.constant 0 : index
    %c0_4 = arith.constant 0 : index
    %3 = vector.load %arg3[%c0_3, %c0_4] : memref<1x512xf32, #tpu.memory_space<vmem>>, vector<1x512xf32>
    %4 = vector.broadcast %3 : vector<1x512xf32> to vector<16x512xf32>
    %5 = arith.addf %2, %4 : vector<16x512xf32>
    %cst_5 = arith.constant 0.000000e+00 : f32
    %6 = vector.broadcast %cst_5 : f32 to vector<16x512xf32>
    %7 = arith.maximumf %5, %6 : vector<16x512xf32>
    %8 = arith.truncf %7 : vector<16x512xf32> to vector<16x512xbf16>
    %c0_6 = arith.constant 0 : index
    %c0_7 = arith.constant 0 : index
    %9 = vector.load %arg4[%c0_6, %c0_7] : memref<512x256xbf16, #tpu.memory_space<vmem>>, vector<512x256xbf16>
    %cst_8 = arith.constant dense<0.000000e+00> : vector<16x256xf32>
    %10 = tpu.matmul %8, %9, %cst_8 {dimension_numbers = #tpu.dot_dimension_numbers<[1], [0], [0], [1], [0, 0, 1, 1], [], []>} : vector<16x512xbf16>, vector<512x256xbf16>, vector<16x256xf32> -> vector<16x256xf32>
    %c0_9 = arith.constant 0 : index
    %c0_10 = arith.constant 0 : index
    %11 = vector.load %arg5[%c0_9, %c0_10] : memref<1x256xf32, #tpu.memory_space<vmem>>, vector<1x256xf32>
    %12 = vector.broadcast %11 : vector<1x256xf32> to vector<16x256xf32>
    %13 = arith.addf %10, %12 : vector<16x256xf32>
    %cst_11 = arith.constant 0.000000e+00 : f32
    %14 = vector.broadcast %cst_11 : f32 to vector<16x256xf32>
    %15 = arith.maximumf %13, %14 : vector<16x256xf32>
    %16 = arith.truncf %15 : vector<16x256xf32> to vector<16x256xbf16>
    %c0_12 = arith.constant 0 : index
    %c0_13 = arith.constant 0 : index
    %17 = vector.load %arg6[%c0_12, %c0_13] : memref<256x128xbf16, #tpu.memory_space<vmem>>, vector<256x128xbf16>
    %cst_14 = arith.constant dense<0.000000e+00> : vector<16x128xf32>
    %18 = tpu.matmul %16, %17, %cst_14 {dimension_numbers = #tpu.dot_dimension_numbers<[1], [0], [0], [1], [0, 0, 1, 1], [], []>} : vector<16x256xbf16>, vector<256x128xbf16>, vector<16x128xf32> -> vector<16x128xf32>
    %c0_15 = arith.constant 0 : index
    %c0_16 = arith.constant 0 : index
    %19 = vector.load %arg7[%c0_15, %c0_16] : memref<1x128xf32, #tpu.memory_space<vmem>>, vector<1x128xf32>
    %20 = vector.broadcast %19 : vector<1x128xf32> to vector<16x128xf32>
    %21 = arith.addf %18, %20 : vector<16x128xf32>
    %cst_17 = arith.constant 0.000000e+00 : f32
    %22 = vector.broadcast %cst_17 : f32 to vector<16x128xf32>
    %23 = arith.maximumf %21, %22 : vector<16x128xf32>
    %24 = arith.truncf %23 : vector<16x128xf32> to vector<16x128xbf16>
    %c0_18 = arith.constant 0 : index
    %c0_19 = arith.constant 0 : index
    %25 = vector.load %arg8[%c0_18, %c0_19] : memref<128x128xbf16, #tpu.memory_space<vmem>>, vector<128x128xbf16>
    %cst_20 = arith.constant dense<0.000000e+00> : vector<16x128xf32>
    %26 = tpu.matmul %24, %25, %cst_20 {dimension_numbers = #tpu.dot_dimension_numbers<[1], [0], [0], [1], [0, 0, 1, 1], [], []>} : vector<16x128xbf16>, vector<128x128xbf16>, vector<16x128xf32> -> vector<16x128xf32>
    %c0_21 = arith.constant 0 : index
    %c0_22 = arith.constant 0 : index
    %27 = vector.load %arg9[%c0_21, %c0_22] : memref<1x128xf32, #tpu.memory_space<vmem>>, vector<1x128xf32>
    %28 = vector.broadcast %27 : vector<1x128xf32> to vector<16x128xf32>
    %29 = arith.addf %26, %28 : vector<16x128xf32>
    %c0_23 = arith.constant 0 : index
    %c0_24 = arith.constant 0 : index
    %30 = vector.load %arg10[%c0_23, %c0_24] : memref<16x128xf32, #tpu.memory_space<vmem>>, vector<16x128xf32>
    tpu.vector_store %arg10[%c0_23, %c0_24], %29 {strides = array<i32>} : memref<16x128xf32, #tpu.memory_space<vmem>>, vector<16x128xf32>,
    return
  }
  func.func @transform_0(%arg0: i32) -> (i32, i32) {
    %c0_i32 = arith.constant 0 : i32
    %c0_i32_0 = arith.constant 0 : i32
    return %arg0, %c0_i32 : i32, i32
  }
  func.func @transform_1(%arg0: i32) -> (i32, i32) {
    %c0_i32 = arith.constant 0 : i32
    %c0_i32_0 = arith.constant 0 : i32
    %c0_i32_1 = arith.constant 0 : i32
    return %c0_i32, %c0_i32_0 : i32, i32
  }
  func.func @transform_2(%arg0: i32) -> (i32, i32) {
    %c0_i32 = arith.constant 0 : i32
    %c0_i32_0 = arith.constant 0 : i32
    %c0_i32_1 = arith.constant 0 : i32
    return %c0_i32, %c0_i32_0 : i32, i32
  }
  func.func @transform_3(%arg0: i32) -> (i32, i32) {
    %c0_i32 = arith.constant 0 : i32
    %c0_i32_0 = arith.constant 0 : i32
    %c0_i32_1 = arith.constant 0 : i32
    return %c0_i32, %c0_i32_0 : i32, i32
  }
  func.func @transform_4(%arg0: i32) -> (i32, i32) {
    %c0_i32 = arith.constant 0 : i32
    %c0_i32_0 = arith.constant 0 : i32
    %c0_i32_1 = arith.constant 0 : i32
    return %c0_i32, %c0_i32_0 : i32, i32
  }
  func.func @transform_5(%arg0: i32) -> (i32, i32) {
    %c0_i32 = arith.constant 0 : i32
    %c0_i32_0 = arith.constant 0 : i32
    %c0_i32_1 = arith.constant 0 : i32
    return %c0_i32, %c0_i32_0 : i32, i32
  }
  func.func @transform_6(%arg0: i32) -> (i32, i32) {
    %c0_i32 = arith.constant 0 : i32
    %c0_i32_0 = arith.constant 0 : i32
    %c0_i32_1 = arith.constant 0 : i32
    return %c0_i32, %c0_i32_0 : i32, i32
  }
  func.func @transform_7(%arg0: i32) -> (i32, i32) {
    %c0_i32 = arith.constant 0 : i32
    %c0_i32_0 = arith.constant 0 : i32
    %c0_i32_1 = arith.constant 0 : i32
    return %c0_i32, %c0_i32_0 : i32, i32
  }
  func.func @transform_8(%arg0: i32) -> (i32, i32) {
    %c0_i32 = arith.constant 0 : i32
    %c0_i32_0 = arith.constant 0 : i32
    %c0_i32_1 = arith.constant 0 : i32
    return %c0_i32, %c0_i32_0 : i32, i32
  }
  func.func @transform_9(%arg0: i32) -> (i32, i32) {
    %c0_i32 = arith.constant 0 : i32
    %c0_i32_0 = arith.constant 0 : i32
    return %arg0, %c0_i32 : i32, i32
  }
}

</mosaic_0001>

<llo_original>
// kernel: simple_net_forward.1
$region0: #{simple_net_forward.1}
  #allocation0 [shape = 'u32[]', space=smem, size = 0x4, offset = 0x4, fixed_abs, tag = 'smem constant byte address 0x4 - core index']
  #allocation1 [shape = 'u32[144,128]{1,0:T(1,128)}', space=vmem, size = 0x12000, scoped, tag = 'internal scratch']
  %s0 = inlined_call_operand.vmem [shape: bf16[16,896], index: 0, kind: input, shape index: {}]
  %s1 = inlined_call_operand.hbm [shape: bf16[896,512], index: 1, kind: input, shape index: {}]
  %s2 = inlined_call_operand.vmem [shape: f32[1,512], index: 2, kind: input, shape index: {}]
  %s3 = inlined_call_operand.vmem [shape: bf16[512,256], index: 3, kind: input, shape index: {}]
  %s4 = inlined_call_operand.vmem [shape: f32[1,256], index: 4, kind: input, shape index: {}]
  %s5 = inlined_call_operand.hbm [shape: bf16[256,128], index: 5, kind: input, shape index: {}]
  %s6 = inlined_call_operand.vmem [shape: f32[1,128], index: 6, kind: input, shape index: {}]
  %s7 = inlined_call_operand.vmem [shape: bf16[128,128], index: 7, kind: input, shape index: {}]
  %s8 = inlined_call_operand.vmem [shape: f32[1,128], index: 8, kind: input, shape index: {}]
  %s9 = inlined_call_operand.vmem [shape: f32[16,128], index: 9, kind: output, shape index: {}]
  %s10 = sld [smem:[#allocation0]]
  $region54: #{simple_net_forward.1} parent=0
    _
  %s12 = ssub.s32 1, %s10
  %s13 = scalar_select 0, %s12, %s10
  $region1: #{simple_net_forward.1} parent=0
    #allocation2 [shape = 'u8[917504]{0}', space=vmem, size = 0xe0000, scoped, tag = 'input window, operand 1, single buffered']
    #allocation3 [shape = 's32[1]{0}', space=sflag, size = 0x4, scoped, tag = 'scoped memory for simple_net_forward.1']
    #allocation4 [shape = 'u8[65536]{0}', space=vmem, size = 0x10000, scoped, tag = 'input window, operand 5, single buffered']
    #allocation5 [shape = 's32[1]{0}', space=sflag, size = 0x4, scoped, tag = 'scoped memory for simple_net_forward.1']
    %14 = vsyncpa [#allocation3], 0
    %15 = vsyncpa [#allocation5], 0
    // Predicated region
    $region2: #{simple_net_forward.1} parent=1 // pred_check
      _
    $region3: #{simple_net_forward.1} parent=1 // pred_check_branch
      %17 = sbr.rel (0) target = $region5
    $region4: #{simple_net_forward.1} parent=1 // pred_region
      _
    $region5: #{simple_net_forward.1} parent=1 // pred_fallthru
      _
    // Predicated region
    $region6: #{simple_net_forward.1} parent=1 // pred_check
      _
    $region7: #{simple_net_forward.1} parent=1 // pred_check_branch
      %19 = sbr.rel (0) target = $region9
    $region8: #{simple_net_forward.1} parent=1 // pred_region
      %s21 = ssub.s32 28672, 28672
      %22 = vsyncadd [#allocation3], %s21
      %s23 = sshll.u32 [#allocation2], 4
      %s24 = int_to_ptr.vmem [resolvable:$true] %s23
      %29 = dma.hbm_to_vmem [thread:$0]  %s1, 28672, %s24, [#allocation3], 256, 256, 16
    $region9: #{simple_net_forward.1} parent=1 // pred_fallthru
      _
    // Predicated region
    $region10: #{simple_net_forward.1} parent=1 // pred_check
      _
    $region11: #{simple_net_forward.1} parent=1 // pred_check_branch
      %31 = sbr.rel (0) target = $region13
    $region12: #{simple_net_forward.1} parent=1 // pred_region
      _
    $region13: #{simple_net_forward.1} parent=1 // pred_fallthru
      _
    // Predicated region
    $region14: #{simple_net_forward.1} parent=1 // pred_check
      _
    $region15: #{simple_net_forward.1} parent=1 // pred_check_branch
      %33 = sbr.rel (0) target = $region17
    $region16: #{simple_net_forward.1} parent=1 // pred_region
      _
    $region17: #{simple_net_forward.1} parent=1 // pred_fallthru
      _
    // Predicated region
    $region18: #{simple_net_forward.1} parent=1 // pred_check
      _
    $region19: #{simple_net_forward.1} parent=1 // pred_check_branch
      %35 = sbr.rel (0) target = $region21
    $region20: #{simple_net_forward.1} parent=1 // pred_region
      _
    $region21: #{simple_net_forward.1} parent=1 // pred_fallthru
      _
    // Predicated region
    $region22: #{simple_net_forward.1} parent=1 // pred_check
      _
    $region23: #{simple_net_forward.1} parent=1 // pred_check_branch
      %37 = sbr.rel (0) target = $region25
    $region24: #{simple_net_forward.1} parent=1 // pred_region
      %s39 = ssub.s32 2048, 2048
      %40 = vsyncadd [#allocation5], %s39
      %s41 = sshll.u32 [#allocation4], 4
      %s42 = int_to_ptr.vmem [resolvable:$true] %s41
      %47 = dma.hbm_to_vmem [thread:$0]  %s5, 2048, %s42, [#allocation5], 64, 64, 4
    $region25: #{simple_net_forward.1} parent=1 // pred_fallthru
      _
    // Predicated region
    $region26: #{simple_net_forward.1} parent=1 // pred_check
      _
    $region27: #{simple_net_forward.1} parent=1 // pred_check_branch
      %49 = sbr.rel (0) target = $region29
    $region28: #{simple_net_forward.1} parent=1 // pred_region
      _
    $region29: #{simple_net_forward.1} parent=1 // pred_fallthru
      _
    // Predicated region
    $region30: #{simple_net_forward.1} parent=1 // pred_check
      _
    $region31: #{simple_net_forward.1} parent=1 // pred_check_branch
      %51 = sbr.rel (0) target = $region33
    $region32: #{simple_net_forward.1} parent=1 // pred_region
      _
    $region33: #{simple_net_forward.1} parent=1 // pred_fallthru
      _
    // Predicated region
    $region34: #{simple_net_forward.1} parent=1 // pred_check
      _
    $region35: #{simple_net_forward.1} parent=1 // pred_check_branch
      %53 = sbr.rel (0) target = $region37
    $region36: #{simple_net_forward.1} parent=1 // pred_region
      _
    $region37: #{simple_net_forward.1} parent=1 // pred_fallthru
      _
    // Predicated region
    $region38: #{simple_net_forward.1} parent=1 // pred_check
      _
    $region39: #{simple_net_forward.1} parent=1 // pred_check_branch
      %55 = sbr.rel (0) target = $region41
    $region40: #{simple_net_forward.1} parent=1 // pred_region
      %56 = dma.done [#allocation3], 28672
    $region41: #{simple_net_forward.1} parent=1 // pred_fallthru
      _
    // Predicated region
    $region42: #{simple_net_forward.1} parent=1 // pred_check
      _
    $region43: #{simple_net_forward.1} parent=1 // pred_check_branch
      %58 = sbr.rel (0) target = $region45
    $region44: #{simple_net_forward.1} parent=1 // pred_region
      %59 = dma.done [#allocation5], 2048
    $region45: #{simple_net_forward.1} parent=1 // pred_fallthru
      _
    %v61 = vld [vmem:[%s0] sm:$0xff]
    %v62 = vld [vmem:[%s0 + $0x8] sm:$0xff]
    %v63 = vld [vmem:[%s0 + $0x10] sm:$0xff]
    %v64 = vld [vmem:[%s0 + $0x18] sm:$0xf]
    %v65 = vld [vmem:[%s0 + $0x1c] sm:$0xff]
    %v66 = vld [vmem:[%s0 + $0x24] sm:$0xff]
    %v67 = vld [vmem:[%s0 + $0x2c] sm:$0xff]
    %v68 = vld [vmem:[%s0 + $0x34] sm:$0xf]
    %v69 = vld [vmem:[#allocation2] sm:$0xff]
    %v70 = vld [vmem:[#allocation2 + $0x8] sm:$0xff]
    %v71 = vld [vmem:[#allocation2 + $0x10] sm:$0xff]
    %v72 = vld [vmem:[#allocation2 + $0x18] sm:$0xff]
    %v73 = vld [vmem:[#allocation2 + $0x20] sm:$0xff]
    %v74 = vld [vmem:[#allocation2 + $0x28] sm:$0xff]
    %v75 = vld [vmem:[#allocation2 + $0x30] sm:$0xff]
    %v76 = vld [vmem:[#allocation2 + $0x38] sm:$0xff]
    %v77 = vld [vmem:[#allocation2 + $0x40] sm:$0xff]
    %v78 = vld [vmem:[#allocation2 + $0x48] sm:$0xff]
    %v79 = vld [vmem:[#allocation2 + $0x50] sm:$0xff]
    %v80 = vld [vmem:[#allocation2 + $0x58] sm:$0xff]
    %v81 = vld [vmem:[#allocation2 + $0x60] sm:$0xff]
    %v82 = vld [vmem:[#allocation2 + $0x68] sm:$0xff]
    %v83 = vld [vmem:[#allocation2 + $0x70] sm:$0xff]
    %v84 = vld [vmem:[#allocation2 + $0x78] sm:$0xff]
    %v85 = vld [vmem:[#allocation2 + $0x80] sm:$0xff]
    %v86 = vld [vmem:[#allocation2 + $0x88] sm:$0xff]
    %v87 = vld [vmem:[#allocation2 + $0x90] sm:$0xff]
    %v88 = vld [vmem:[#allocation2 + $0x98] sm:$0xff]
    %v89 = vld [vmem:[#allocation2 + $0xa0] sm:$0xff]
    %v90 = vld [vmem:[#allocation2 + $0xa8] sm:$0xff]
    %v91 = vld [vmem:[#allocation2 + $0xb0] sm:$0xff]
    %v92 = vld [vmem:[#allocation2 + $0xb8] sm:$0xff]
    %v93 = vld [vmem:[#allocation2 + $0xc0] sm:$0xff]
    %v94 = vld [vmem:[#allocation2 + $0xc8] sm:$0xff]
    %v95 = vld [vmem:[#allocation2 + $0xd0] sm:$0xff]
    %v96 = vld [vmem:[#allocation2 + $0xd8] sm:$0xff]
    %v97 = vld [vmem:[#allocation2 + $0xe0] sm:$0xff]
    %v98 = vld [vmem:[#allocation2 + $0xe8] sm:$0xff]
    %v99 = vld [vmem:[#allocation2 + $0xf0] sm:$0xff]
    %v100 = vld [vmem:[#allocation2 + $0xf8] sm:$0xff]
    %v101 = vld [vmem:[#allocation2 + $0x100] sm:$0xff]
    %v102 = vld [vmem:[#allocation2 + $0x108] sm:$0xff]
    %v103 = vld [vmem:[#allocation2 + $0x110] sm:$0xff]
    %v104 = vld [vmem:[#allocation2 + $0x118] sm:$0xff]
    %v105 = vld [vmem:[#allocation2 + $0x120] sm:$0xff]
    %v106 = vld [vmem:[#allocation2 + $0x128] sm:$0xff]
    %v107 = vld [vmem:[#allocation2 + $0x130] sm:$0xff]
    %v108 = vld [vmem:[#allocation2 + $0x138] sm:$0xff]
    %v109 = vld [vmem:[#allocation2 + $0x140] sm:$0xff]
    %v110 = vld [vmem:[#allocation2 + $0x148] sm:$0xff]
    %v111 = vld [vmem:[#allocation2 + $0x150] sm:$0xff]
    %v112 = vld [vmem:[#allocation2 + $0x158] sm:$0xff]
    %v113 = vld [vmem:[#allocation2 + $0x160] sm:$0xff]
    %v114 = vld [vmem:[#allocation2 + $0x168] sm:$0xff]
    %v115 = vld [vmem:[#allocation2 + $0x170] sm:$0xff]
    %v116 = vld [vmem:[#allocation2 + $0x178] sm:$0xff]
    %v117 = vld [vmem:[#allocation2 + $0x180] sm:$0xff]
    %v118 = vld [vmem:[#allocation2 + $0x188] sm:$0xff]
    %v119 = vld [vmem:[#allocation2 + $0x190] sm:$0xff]
    %v120 = vld [vmem:[#allocation2 + $0x198] sm:$0xff]
    %v121 = vld [vmem:[#allocation2 + $0x1a0] sm:$0xff]
    %v122 = vld [vmem:[#allocation2 + $0x1a8] sm:$0xff]
    %v123 = vld [vmem:[#allocation2 + $0x1b0] sm:$0xff]
    %v124 = vld [vmem:[#allocation2 + $0x1b8] sm:$0xff]
    %v125 = vld [vmem:[#allocation2 + $0x1c0] sm:$0xff]
    %v126 = vld [vmem:[#allocation2 + $0x1c8] sm:$0xff]
    %v127 = vld [vmem:[#allocation2 + $0x1d0] sm:$0xff]
    %v128 = vld [vmem:[#allocation2 + $0x1d8] sm:$0xff]
    %v129 = vld [vmem:[#allocation2 + $0x1e0] sm:$0xff]
    %v130 = vld [vmem:[#allocation2 + $0x1e8] sm:$0xff]
    %v131 = vld [vmem:[#allocation2 + $0x1f0] sm:$0xff]
    %v132 = vld [vmem:[#allocation2 + $0x1f8] sm:$0xff]
    %v133 = vld [vmem:[#allocation2 + $0x200] sm:$0xff]
    %v134 = vld [vmem:[#allocation2 + $0x208] sm:$0xff]
    %v135 = vld [vmem:[#allocation2 + $0x210] sm:$0xff]
    %v136 = vld [vmem:[#allocation2 + $0x218] sm:$0xff]
    %v137 = vld [vmem:[#allocation2 + $0x220] sm:$0xff]
    %v138 = vld [vmem:[#allocation2 + $0x228] sm:$0xff]
    %v139 = vld [vmem:[#allocation2 + $0x230] sm:$0xff]
    %v140 = vld [vmem:[#allocation2 + $0x238] sm:$0xff]
    %v141 = vld [vmem:[#allocation2 + $0x240] sm:$0xff]
    %v142 = vld [vmem:[#allocation2 + $0x248] sm:$0xff]
    %v143 = vld [vmem:[#allocation2 + $0x250] sm:$0xff]
    %v144 = vld [vmem:[#allocation2 + $0x258] sm:$0xff]
    %v145 = vld [vmem:[#allocation2 + $0x260] sm:$0xff]
    %v146 = vld [vmem:[#allocation2 + $0x268] sm:$0xff]
    %v147 = vld [vmem:[#allocation2 + $0x270] sm:$0xff]
    %v148 = vld [vmem:[#allocation2 + $0x278] sm:$0xff]
    %v149 = vld [vmem:[#allocation2 + $0x280] sm:$0xff]
    %v150 = vld [vmem:[#allocation2 + $0x288] sm:$0xff]
    %v151 = vld [vmem:[#allocation2 + $0x290] sm:$0xff]
    %v152 = vld [vmem:[#allocation2 + $0x298] sm:$0xff]
    %v153 = vld [vmem:[#allocation2 + $0x2a0] sm:$0xff]
    %v154 = vld [vmem:[#allocation2 + $0x2a8] sm:$0xff]
    %v155 = vld [vmem:[#allocation2 + $0x2b0] sm:$0xff]
    %v156 = vld [vmem:[#allocation2 + $0x2b8] sm:$0xff]
    %v157 = vld [vmem:[#allocation2 + $0x2c0] sm:$0xff]
    %v158 = vld [vmem:[#allocation2 + $0x2c8] sm:$0xff]
    %v159 = vld [vmem:[#allocation2 + $0x2d0] sm:$0xff]
    %v160 = vld [vmem:[#allocation2 + $0x2d8] sm:$0xff]
    %v161 = vld [vmem:[#allocation2 + $0x2e0] sm:$0xff]
    %v162 = vld [vmem:[#allocation2 + $0x2e8] sm:$0xff]
    %v163 = vld [vmem:[#allocation2 + $0x2f0] sm:$0xff]
    %v164 = vld [vmem:[#allocation2 + $0x2f8] sm:$0xff]
    %v165 = vld [vmem:[#allocation2 + $0x300] sm:$0xff]
    %v166 = vld [vmem:[#allocation2 + $0x308] sm:$0xff]
    %v167 = vld [vmem:[#allocation2 + $0x310] sm:$0xff]
    %v168 = vld [vmem:[#allocation2 + $0x318] sm:$0xff]
    %v169 = vld [vmem:[#allocation2 + $0x320] sm:$0xff]
    %v170 = vld [vmem:[#allocation2 + $0x328] sm:$0xff]
    %v171 = vld [vmem:[#allocation2 + $0x330] sm:$0xff]
    %v172 = vld [vmem:[#allocation2 + $0x338] sm:$0xff]
    %v173 = vld [vmem:[#allocation2 + $0x340] sm:$0xff]
    %v174 = vld [vmem:[#allocation2 + $0x348] sm:$0xff]
    %v175 = vld [vmem:[#allocation2 + $0x350] sm:$0xff]
    %v176 = vld [vmem:[#allocation2 + $0x358] sm:$0xff]
    %v177 = vld [vmem:[#allocation2 + $0x360] sm:$0xff]
    %v178 = vld [vmem:[#allocation2 + $0x368] sm:$0xff]
    %v179 = vld [vmem:[#allocation2 + $0x370] sm:$0xff]
    %v180 = vld [vmem:[#allocation2 + $0x378] sm:$0xff]
    %v181 = vld [vmem:[#allocation2 + $0x380] sm:$0xff]
    %v182 = vld [vmem:[#allocation2 + $0x388] sm:$0xff]
    %v183 = vld [vmem:[#allocation2 + $0x390] sm:$0xff]
    %v184 = vld [vmem:[#allocation2 + $0x398] sm:$0xff]
    %v185 = vld [vmem:[#allocation2 + $0x3a0] sm:$0xff]
    %v186 = vld [vmem:[#allocation2 + $0x3a8] sm:$0xff]
    %v187 = vld [vmem:[#allocation2 + $0x3b0] sm:$0xff]
    %v188 = vld [vmem:[#allocation2 + $0x3b8] sm:$0xff]
    %v189 = vld [vmem:[#allocation2 + $0x3c0] sm:$0xff]
    %v190 = vld [vmem:[#allocation2 + $0x3c8] sm:$0xff]
    %v191 = vld [vmem:[#allocation2 + $0x3d0] sm:$0xff]
    %v192 = vld [vmem:[#allocation2 + $0x3d8] sm:$0xff]
    %v193 = vld [vmem:[#allocation2 + $0x3e0] sm:$0xff]
    %v194 = vld [vmem:[#allocation2 + $0x3e8] sm:$0xff]
    %v195 = vld [vmem:[#allocation2 + $0x3f0] sm:$0xff]
    %v196 = vld [vmem:[#allocation2 + $0x3f8] sm:$0xff]
    %v197 = vld [vmem:[#allocation2 + $0x400] sm:$0xff]
    %v198 = vld [vmem:[#allocation2 + $0x408] sm:$0xff]
    %v199 = vld [vmem:[#allocation2 + $0x410] sm:$0xff]
    %v200 = vld [vmem:[#allocation2 + $0x418] sm:$0xff]
    %v201 = vld [vmem:[#allocation2 + $0x420] sm:$0xff]
    %v202 = vld [vmem:[#allocation2 + $0x428] sm:$0xff]
    %v203 = vld [vmem:[#allocation2 + $0x430] sm:$0xff]
    %v204 = vld [vmem:[#allocation2 + $0x438] sm:$0xff]
    %v205 = vld [vmem:[#allocation2 + $0x440] sm:$0xff]
    %v206 = vld [vmem:[#allocation2 + $0x448] sm:$0xff]
    %v207 = vld [vmem:[#allocation2 + $0x450] sm:$0xff]
    %v208 = vld [vmem:[#allocation2 + $0x458] sm:$0xff]
    %v209 = vld [vmem:[#allocation2 + $0x460] sm:$0xff]
    %v210 = vld [vmem:[#allocation2 + $0x468] sm:$0xff]
    %v211 = vld [vmem:[#allocation2 + $0x470] sm:$0xff]
    %v212 = vld [vmem:[#allocation2 + $0x478] sm:$0xff]
    %v213 = vld [vmem:[#allocation2 + $0x480] sm:$0xff]
    %v214 = vld [vmem:[#allocation2 + $0x488] sm:$0xff]
    %v215 = vld [vmem:[#allocation2 + $0x490] sm:$0xff]
    %v216 = vld [vmem:[#allocation2 + $0x498] sm:$0xff]
    %v217 = vld [vmem:[#allocation2 + $0x4a0] sm:$0xff]
    %v218 = vld [vmem:[#allocation2 + $0x4a8] sm:$0xff]
    %v219 = vld [vmem:[#allocation2 + $0x4b0] sm:$0xff]
    %v220 = vld [vmem:[#allocation2 + $0x4b8] sm:$0xff]
    %v221 = vld [vmem:[#allocation2 + $0x4c0] sm:$0xff]
    %v222 = vld [vmem:[#allocation2 + $0x4c8] sm:$0xff]
    %v223 = vld [vmem:[#allocation2 + $0x4d0] sm:$0xff]
    %v224 = vld [vmem:[#allocation2 + $0x4d8] sm:$0xff]
    %v225 = vld [vmem:[#allocation2 + $0x4e0] sm:$0xff]
    %v226 = vld [vmem:[#allocation2 + $0x4e8] sm:$0xff]
    %v227 = vld [vmem:[#allocation2 + $0x4f0] sm:$0xff]
    %v228 = vld [vmem:[#allocation2 + $0x4f8] sm:$0xff]
    %v229 = vld [vmem:[#allocation2 + $0x500] sm:$0xff]
    %v230 = vld [vmem:[#allocation2 + $0x508] sm:$0xff]
    %v231 = vld [vmem:[#allocation2 + $0x510] sm:$0xff]
    %v232 = vld [vmem:[#allocation2 + $0x518] sm:$0xff]
    %v233 = vld [vmem:[#allocation2 + $0x520] sm:$0xff]
    %v234 = vld [vmem:[#allocation2 + $0x528] sm:$0xff]
    %v235 = vld [vmem:[#allocation2 + $0x530] sm:$0xff]
    %v236 = vld [vmem:[#allocation2 + $0x538] sm:$0xff]
    %v237 = vld [vmem:[#allocation2 + $0x540] sm:$0xff]
    %v238 = vld [vmem:[#allocation2 + $0x548] sm:$0xff]
    %v239 = vld [vmem:[#allocation2 + $0x550] sm:$0xff]
    %v240 = vld [vmem:[#allocation2 + $0x558] sm:$0xff]
    %v241 = vld [vmem:[#allocation2 + $0x560] sm:$0xff]
    %v242 = vld [vmem:[#allocation2 + $0x568] sm:$0xff]
    %v243 = vld [vmem:[#allocation2 + $0x570] sm:$0xff]
    %v244 = vld [vmem:[#allocation2 + $0x578] sm:$0xff]
    %v245 = vld [vmem:[#allocation2 + $0x580] sm:$0xff]
    %v246 = vld [vmem:[#allocation2 + $0x588] sm:$0xff]
    %v247 = vld [vmem:[#allocation2 + $0x590] sm:$0xff]
    %v248 = vld [vmem:[#allocation2 + $0x598] sm:$0xff]
    %v249 = vld [vmem:[#allocation2 + $0x5a0] sm:$0xff]
    %v250 = vld [vmem:[#allocation2 + $0x5a8] sm:$0xff]
    %v251 = vld [vmem:[#allocation2 + $0x5b0] sm:$0xff]
    %v252 = vld [vmem:[#allocation2 + $0x5b8] sm:$0xff]
    %v253 = vld [vmem:[#allocation2 + $0x5c0] sm:$0xff]
    %v254 = vld [vmem:[#allocation2 + $0x5c8] sm:$0xff]
    %v255 = vld [vmem:[#allocation2 + $0x5d0] sm:$0xff]
    %v256 = vld [vmem:[#allocation2 + $0x5d8] sm:$0xff]
    %v257 = vld [vmem:[#allocation2 + $0x5e0] sm:$0xff]
    %v258 = vld [vmem:[#allocation2 + $0x5e8] sm:$0xff]
    %v259 = vld [vmem:[#allocation2 + $0x5f0] sm:$0xff]
    %v260 = vld [vmem:[#allocation2 + $0x5f8] sm:$0xff]
    %v261 = vld [vmem:[#allocation2 + $0x600] sm:$0xff]
    %v262 = vld [vmem:[#allocation2 + $0x608] sm:$0xff]
    %v263 = vld [vmem:[#allocation2 + $0x610] sm:$0xff]
    %v264 = vld [vmem:[#allocation2 + $0x618] sm:$0xff]
    %v265 = vld [vmem:[#allocation2 + $0x620] sm:$0xff]
    %v266 = vld [vmem:[#allocation2 + $0x628] sm:$0xff]
    %v267 = vld [vmem:[#allocation2 + $0x630] sm:$0xff]
    %v268 = vld [vmem:[#allocation2 + $0x638] sm:$0xff]
    %v269 = vld [vmem:[#allocation2 + $0x640] sm:$0xff]
    %v270 = vld [vmem:[#allocation2 + $0x648] sm:$0xff]
    %v271 = vld [vmem:[#allocation2 + $0x650] sm:$0xff]
    %v272 = vld [vmem:[#allocation2 + $0x658] sm:$0xff]
    %v273 = vld [vmem:[#allocation2 + $0x660] sm:$0xff]
    %v274 = vld [vmem:[#allocation2 + $0x668] sm:$0xff]
    %v275 = vld [vmem:[#allocation2 + $0x670] sm:$0xff]
    %v276 = vld [vmem:[#allocation2 + $0x678] sm:$0xff]
    %v277 = vld [vmem:[#allocation2 + $0x680] sm:$0xff]
    %v278 = vld [vmem:[#allocation2 + $0x688] sm:$0xff]
    %v279 = vld [vmem:[#allocation2 + $0x690] sm:$0xff]
    %v280 = vld [vmem:[#allocation2 + $0x698] sm:$0xff]
    %v281 = vld [vmem:[#allocation2 + $0x6a0] sm:$0xff]
    %v282 = vld [vmem:[#allocation2 + $0x6a8] sm:$0xff]
    %v283 = vld [vmem:[#allocation2 + $0x6b0] sm:$0xff]
    %v284 = vld [vmem:[#allocation2 + $0x6b8] sm:$0xff]
    %v285 = vld [vmem:[#allocation2 + $0x6c0] sm:$0xff]
    %v286 = vld [vmem:[#allocation2 + $0x6c8] sm:$0xff]
    %v287 = vld [vmem:[#allocation2 + $0x6d0] sm:$0xff]
    %v288 = vld [vmem:[#allocation2 + $0x6d8] sm:$0xff]
    %v289 = vld [vmem:[#allocation2 + $0x6e0] sm:$0xff]
    %v290 = vld [vmem:[#allocation2 + $0x6e8] sm:$0xff]
    %v291 = vld [vmem:[#allocation2 + $0x6f0] sm:$0xff]
    %v292 = vld [vmem:[#allocation2 + $0x6f8] sm:$0xff]
    %v293 = vld [vmem:[%s2] sm:$0xf]
    %v295 = vlaneseq
    %v296 = vshrl.u32 %v295, 7
    %v297 = vsub.s32 0, %v296
    %v298 = vrot.slane %v293, %v297
    %v299 = vlaneseq
    %v300 = vshrl.u32 %v299, 7
    %v301 = vsub.s32 1, %v300
    %v302 = vrot.slane %v293, %v301
    %v303 = vlaneseq
    %v304 = vshrl.u32 %v303, 7
    %v305 = vsub.s32 2, %v304
    %v306 = vrot.slane %v293, %v305
    %v307 = vlaneseq
    %v308 = vshrl.u32 %v307, 7
    %v309 = vsub.s32 3, %v308
    %v310 = vrot.slane %v293, %v309
    %v323 = vunpack.c.l.b16 %v61
    %v324 = vunpack.c.h.b16 %v61
    %v325 = vunpack.c.l.b16 %v62
    %v326 = vunpack.c.h.b16 %v62
    %v327 = vunpack.c.l.b16 %v63
    %v328 = vunpack.c.h.b16 %v63
    %v329 = vunpack.c.l.b16 %v64
    %v330 = vunpack.c.l.b16 %v65
    %v331 = vunpack.c.h.b16 %v65
    %v332 = vunpack.c.l.b16 %v66
    %v333 = vunpack.c.h.b16 %v66
    %v334 = vunpack.c.l.b16 %v67
    %v335 = vunpack.c.h.b16 %v67
    %v336 = vunpack.c.l.b16 %v68
    %v337 = vpack.c.b16 %v330, %v323
    %v338 = vpack.c.b16 %v331, %v324
    %v339 = vpack.c.b16 %v332, %v325
    %v340 = vpack.c.b16 %v333, %v326
    %v341 = vpack.c.b16 %v334, %v327
    %v342 = vpack.c.b16 %v335, %v328
    %v343 = vpack.c.b16 %v336, %v329
    %v575 = vunpack.c.l.b16 %v69
    %v576 = vunpack.c.h.b16 %v69
    %v577 = vunpack.c.l.b16 %v70
    %v578 = vunpack.c.h.b16 %v70
    %v579 = vunpack.c.l.b16 %v71
    %v580 = vunpack.c.h.b16 %v71
    %v581 = vunpack.c.l.b16 %v72
    %v582 = vunpack.c.h.b16 %v72
    %v583 = vunpack.c.l.b16 %v73
    %v584 = vunpack.c.h.b16 %v73
    %v585 = vunpack.c.l.b16 %v74
    %v586 = vunpack.c.h.b16 %v74
    %v587 = vunpack.c.l.b16 %v75
    %v588 = vunpack.c.h.b16 %v75
    %v589 = vunpack.c.l.b16 %v76
    %v590 = vunpack.c.h.b16 %v76
    %v591 = vunpack.c.l.b16 %v77
    %v592 = vunpack.c.h.b16 %v77
    %v593 = vunpack.c.l.b16 %v78
    %v594 = vunpack.c.h.b16 %v78
    %v595 = vunpack.c.l.b16 %v79
    %v596 = vunpack.c.h.b16 %v79
    %v597 = vunpack.c.l.b16 %v80
    %v598 = vunpack.c.h.b16 %v80
    %v599 = vunpack.c.l.b16 %v81
    %v600 = vunpack.c.h.b16 %v81
    %v601 = vunpack.c.l.b16 %v82
    %v602 = vunpack.c.h.b16 %v82
    %v603 = vunpack.c.l.b16 %v83
    %v604 = vunpack.c.h.b16 %v83
    %v605 = vunpack.c.l.b16 %v84
    %v606 = vunpack.c.h.b16 %v84
    %v607 = vunpack.c.l.b16 %v85
    %v608 = vunpack.c.h.b16 %v85
    %v609 = vunpack.c.l.b16 %v86
    %v610 = vunpack.c.h.b16 %v86
    %v611 = vunpack.c.l.b16 %v87
    %v612 = vunpack.c.h.b16 %v87
    %v613 = vunpack.c.l.b16 %v88
    %v614 = vunpack.c.h.b16 %v88
    %v615 = vunpack.c.l.b16 %v89
    %v616 = vunpack.c.h.b16 %v89
    %v617 = vunpack.c.l.b16 %v90
    %v618 = vunpack.c.h.b16 %v90
    %v619 = vunpack.c.l.b16 %v91
    %v620 = vunpack.c.h.b16 %v91
    %v621 = vunpack.c.l.b16 %v92
    %v622 = vunpack.c.h.b16 %v92
    %v623 = vunpack.c.l.b16 %v93
    %v624 = vunpack.c.h.b16 %v93
    %v625 = vunpack.c.l.b16 %v94
    %v626 = vunpack.c.h.b16 %v94
    %v627 = vunpack.c.l.b16 %v95
    %v628 = vunpack.c.h.b16 %v95
    %v629 = vunpack.c.l.b16 %v96
    %v630 = vunpack.c.h.b16 %v96
    %v631 = vunpack.c.l.b16 %v97
    %v632 = vunpack.c.h.b16 %v97
    %v633 = vunpack.c.l.b16 %v98
    %v634 = vunpack.c.h.b16 %v98
    %v635 = vunpack.c.l.b16 %v99
    %v636 = vunpack.c.h.b16 %v99
    %v637 = vunpack.c.l.b16 %v100
    %v638 = vunpack.c.h.b16 %v100
    %v639 = vunpack.c.l.b16 %v101
    %v640 = vunpack.c.h.b16 %v101
    %v641 = vunpack.c.l.b16 %v102
    %v642 = vunpack.c.h.b16 %v102
    %v643 = vunpack.c.l.b16 %v103
    %v644 = vunpack.c.h.b16 %v103
    %v645 = vunpack.c.l.b16 %v104
    %v646 = vunpack.c.h.b16 %v104
    %v647 = vunpack.c.l.b16 %v105
    %v648 = vunpack.c.h.b16 %v105
    %v649 = vunpack.c.l.b16 %v106
    %v650 = vunpack.c.h.b16 %v106
    %v651 = vunpack.c.l.b16 %v107
    %v652 = vunpack.c.h.b16 %v107
    %v653 = vunpack.c.l.b16 %v108
    %v654 = vunpack.c.h.b16 %v108
    %v655 = vunpack.c.l.b16 %v109
    %v656 = vunpack.c.h.b16 %v109
    %v657 = vunpack.c.l.b16 %v110
    %v658 = vunpack.c.h.b16 %v110
    %v659 = vunpack.c.l.b16 %v111
    %v660 = vunpack.c.h.b16 %v111
    %v661 = vunpack.c.l.b16 %v112
    %v662 = vunpack.c.h.b16 %v112
    %v663 = vunpack.c.l.b16 %v113
    %v664 = vunpack.c.h.b16 %v113
    %v665 = vunpack.c.l.b16 %v114
    %v666 = vunpack.c.h.b16 %v114
    %v667 = vunpack.c.l.b16 %v115
    %v668 = vunpack.c.h.b16 %v115
    %v669 = vunpack.c.l.b16 %v116
    %v670 = vunpack.c.h.b16 %v116
    %v671 = vunpack.c.l.b16 %v117
    %v672 = vunpack.c.h.b16 %v117
    %v673 = vunpack.c.l.b16 %v118
    %v674 = vunpack.c.h.b16 %v118
    %v675 = vunpack.c.l.b16 %v119
    %v676 = vunpack.c.h.b16 %v119
    %v677 = vunpack.c.l.b16 %v120
    %v678 = vunpack.c.h.b16 %v120
    %v679 = vunpack.c.l.b16 %v121
    %v680 = vunpack.c.h.b16 %v121
    %v681 = vunpack.c.l.b16 %v122
    %v682 = vunpack.c.h.b16 %v122
    %v683 = vunpack.c.l.b16 %v123
    %v684 = vunpack.c.h.b16 %v123
    %v685 = vunpack.c.l.b16 %v124
    %v686 = vunpack.c.h.b16 %v124
    %v687 = vunpack.c.l.b16 %v125
    %v688 = vunpack.c.h.b16 %v125
    %v689 = vunpack.c.l.b16 %v126
    %v690 = vunpack.c.h.b16 %v126
    %v691 = vunpack.c.l.b16 %v127
    %v692 = vunpack.c.h.b16 %v127
    %v693 = vunpack.c.l.b16 %v128
    %v694 = vunpack.c.h.b16 %v128
    %v695 = vunpack.c.l.b16 %v129
    %v696 = vunpack.c.h.b16 %v129
    %v697 = vunpack.c.l.b16 %v130
    %v698 = vunpack.c.h.b16 %v130
    %v699 = vunpack.c.l.b16 %v131
    %v700 = vunpack.c.h.b16 %v131
    %v701 = vunpack.c.l.b16 %v132
    %v702 = vunpack.c.h.b16 %v132
    %v703 = vunpack.c.l.b16 %v133
    %v704 = vunpack.c.h.b16 %v133
    %v705 = vunpack.c.l.b16 %v134
    %v706 = vunpack.c.h.b16 %v134
    %v707 = vunpack.c.l.b16 %v135
    %v708 = vunpack.c.h.b16 %v135
    %v709 = vunpack.c.l.b16 %v136
    %v710 = vunpack.c.h.b16 %v136
    %v711 = vunpack.c.l.b16 %v137
    %v712 = vunpack.c.h.b16 %v137
    %v713 = vunpack.c.l.b16 %v138
    %v714 = vunpack.c.h.b16 %v138
    %v715 = vunpack.c.l.b16 %v139
    %v716 = vunpack.c.h.b16 %v139
    %v717 = vunpack.c.l.b16 %v140
    %v718 = vunpack.c.h.b16 %v140
    %v719 = vunpack.c.l.b16 %v141
    %v720 = vunpack.c.h.b16 %v141
    %v721 = vunpack.c.l.b16 %v142
    %v722 = vunpack.c.h.b16 %v142
    %v723 = vunpack.c.l.b16 %v143
    %v724 = vunpack.c.h.b16 %v143
    %v725 = vunpack.c.l.b16 %v144
    %v726 = vunpack.c.h.b16 %v144
    %v727 = vunpack.c.l.b16 %v145
    %v728 = vunpack.c.h.b16 %v145
    %v729 = vunpack.c.l.b16 %v146
    %v730 = vunpack.c.h.b16 %v146
    %v731 = vunpack.c.l.b16 %v147
    %v732 = vunpack.c.h.b16 %v147
    %v733 = vunpack.c.l.b16 %v148
    %v734 = vunpack.c.h.b16 %v148
    %v735 = vunpack.c.l.b16 %v149
    %v736 = vunpack.c.h.b16 %v149
    %v737 = vunpack.c.l.b16 %v150
    %v738 = vunpack.c.h.b16 %v150
    %v739 = vunpack.c.l.b16 %v151
    %v740 = vunpack.c.h.b16 %v151
    %v741 = vunpack.c.l.b16 %v152
    %v742 = vunpack.c.h.b16 %v152
    %v743 = vunpack.c.l.b16 %v153
    %v744 = vunpack.c.h.b16 %v153
    %v745 = vunpack.c.l.b16 %v154
    %v746 = vunpack.c.h.b16 %v154
    %v747 = vunpack.c.l.b16 %v155
    %v748 = vunpack.c.h.b16 %v155
    %v749 = vunpack.c.l.b16 %v156
    %v750 = vunpack.c.h.b16 %v156
    %v751 = vunpack.c.l.b16 %v157
    %v752 = vunpack.c.h.b16 %v157
    %v753 = vunpack.c.l.b16 %v158
    %v754 = vunpack.c.h.b16 %v158
    %v755 = vunpack.c.l.b16 %v159
    %v756 = vunpack.c.h.b16 %v159
    %v757 = vunpack.c.l.b16 %v160
    %v758 = vunpack.c.h.b16 %v160
    %v759 = vunpack.c.l.b16 %v161
    %v760 = vunpack.c.h.b16 %v161
    %v761 = vunpack.c.l.b16 %v162
    %v762 = vunpack.c.h.b16 %v162
    %v763 = vunpack.c.l.b16 %v163
    %v764 = vunpack.c.h.b16 %v163
    %v765 = vunpack.c.l.b16 %v164
    %v766 = vunpack.c.h.b16 %v164
    %v767 = vunpack.c.l.b16 %v165
    %v768 = vunpack.c.h.b16 %v165
    %v769 = vunpack.c.l.b16 %v166
    %v770 = vunpack.c.h.b16 %v166
    %v771 = vunpack.c.l.b16 %v167
    %v772 = vunpack.c.h.b16 %v167
    %v773 = vunpack.c.l.b16 %v168
    %v774 = vunpack.c.h.b16 %v168
    %v775 = vunpack.c.l.b16 %v169
    %v776 = vunpack.c.h.b16 %v169
    %v777 = vunpack.c.l.b16 %v170
    %v778 = vunpack.c.h.b16 %v170
    %v779 = vunpack.c.l.b16 %v171
    %v780 = vunpack.c.h.b16 %v171
    %v781 = vunpack.c.l.b16 %v172
    %v782 = vunpack.c.h.b16 %v172
    %v783 = vunpack.c.l.b16 %v173
    %v784 = vunpack.c.h.b16 %v173
    %v785 = vunpack.c.l.b16 %v174
    %v786 = vunpack.c.h.b16 %v174
    %v787 = vunpack.c.l.b16 %v175
    %v788 = vunpack.c.h.b16 %v175
    %v789 = vunpack.c.l.b16 %v176
    %v790 = vunpack.c.h.b16 %v176
    %v791 = vunpack.c.l.b16 %v177
    %v792 = vunpack.c.h.b16 %v177
    %v793 = vunpack.c.l.b16 %v178
    %v794 = vunpack.c.h.b16 %v178
    %v795 = vunpack.c.l.b16 %v179
    %v796 = vunpack.c.h.b16 %v179
    %v797 = vunpack.c.l.b16 %v180
    %v798 = vunpack.c.h.b16 %v180
    %v799 = vunpack.c.l.b16 %v181
    %v800 = vunpack.c.h.b16 %v181
    %v801 = vunpack.c.l.b16 %v182
    %v802 = vunpack.c.h.b16 %v182
    %v803 = vunpack.c.l.b16 %v183
    %v804 = vunpack.c.h.b16 %v183
    %v805 = vunpack.c.l.b16 %v184
    %v806 = vunpack.c.h.b16 %v184
    %v807 = vunpack.c.l.b16 %v185
    %v808 = vunpack.c.h.b16 %v185
    %v809 = vunpack.c.l.b16 %v186
    %v810 = vunpack.c.h.b16 %v186
    %v811 = vunpack.c.l.b16 %v187
    %v812 = vunpack.c.h.b16 %v187
    %v813 = vunpack.c.l.b16 %v188
    %v814 = vunpack.c.h.b16 %v188
    %v815 = vunpack.c.l.b16 %v189
    %v816 = vunpack.c.h.b16 %v189
    %v817 = vunpack.c.l.b16 %v190
    %v818 = vunpack.c.h.b16 %v190
    %v819 = vunpack.c.l.b16 %v191
    %v820 = vunpack.c.h.b16 %v191
    %v821 = vunpack.c.l.b16 %v192
    %v822 = vunpack.c.h.b16 %v192
    %v823 = vunpack.c.l.b16 %v193
    %v824 = vunpack.c.h.b16 %v193
    %v825 = vunpack.c.l.b16 %v194
    %v826 = vunpack.c.h.b16 %v194
    %v827 = vunpack.c.l.b16 %v195
    %v828 = vunpack.c.h.b16 %v195
    %v829 = vunpack.c.l.b16 %v196
    %v830 = vunpack.c.h.b16 %v196
    %v831 = vunpack.c.l.b16 %v197
    %v832 = vunpack.c.h.b16 %v197
    %v833 = vunpack.c.l.b16 %v198
    %v834 = vunpack.c.h.b16 %v198
    %v835 = vunpack.c.l.b16 %v199
    %v836 = vunpack.c.h.b16 %v199
    %v837 = vunpack.c.l.b16 %v200
    %v838 = vunpack.c.h.b16 %v200
    %v839 = vunpack.c.l.b16 %v201
    %v840 = vunpack.c.h.b16 %v201
    %v841 = vunpack.c.l.b16 %v202
    %v842 = vunpack.c.h.b16 %v202
    %v843 = vunpack.c.l.b16 %v203
    %v844 = vunpack.c.h.b16 %v203
    %v845 = vunpack.c.l.b16 %v204
    %v846 = vunpack.c.h.b16 %v204
    %v847 = vunpack.c.l.b16 %v205
    %v848 = vunpack.c.h.b16 %v205
    %v849 = vunpack.c.l.b16 %v206
    %v850 = vunpack.c.h.b16 %v206
    %v851 = vunpack.c.l.b16 %v207
    %v852 = vunpack.c.h.b16 %v207
    %v853 = vunpack.c.l.b16 %v208
    %v854 = vunpack.c.h.b16 %v208
    %v855 = vunpack.c.l.b16 %v209
    %v856 = vunpack.c.h.b16 %v209
    %v857 = vunpack.c.l.b16 %v210
    %v858 = vunpack.c.h.b16 %v210
    %v859 = vunpack.c.l.b16 %v211
    %v860 = vunpack.c.h.b16 %v211
    %v861 = vunpack.c.l.b16 %v212
    %v862 = vunpack.c.h.b16 %v212
    %v863 = vunpack.c.l.b16 %v213
    %v864 = vunpack.c.h.b16 %v213
    %v865 = vunpack.c.l.b16 %v214
    %v866 = vunpack.c.h.b16 %v214
    %v867 = vunpack.c.l.b16 %v215
    %v868 = vunpack.c.h.b16 %v215
    %v869 = vunpack.c.l.b16 %v216
    %v870 = vunpack.c.h.b16 %v216
    %v871 = vunpack.c.l.b16 %v217
    %v872 = vunpack.c.h.b16 %v217
    %v873 = vunpack.c.l.b16 %v218
    %v874 = vunpack.c.h.b16 %v218
    %v875 = vunpack.c.l.b16 %v219
    %v876 = vunpack.c.h.b16 %v219
    %v877 = vunpack.c.l.b16 %v220
    %v878 = vunpack.c.h.b16 %v220
    %v879 = vunpack.c.l.b16 %v221
    %v880 = vunpack.c.h.b16 %v221
    %v881 = vunpack.c.l.b16 %v222
    %v882 = vunpack.c.h.b16 %v222
    %v883 = vunpack.c.l.b16 %v223
    %v884 = vunpack.c.h.b16 %v223
    %v885 = vunpack.c.l.b16 %v224
    %v886 = vunpack.c.h.b16 %v224
    %v887 = vunpack.c.l.b16 %v225
    %v888 = vunpack.c.h.b16 %v225
    %v889 = vunpack.c.l.b16 %v226
    %v890 = vunpack.c.h.b16 %v226
    %v891 = vunpack.c.l.b16 %v227
    %v892 = vunpack.c.h.b16 %v227
    %v893 = vunpack.c.l.b16 %v228
    %v894 = vunpack.c.h.b16 %v228
    %v895 = vunpack.c.l.b16 %v229
    %v896 = vunpack.c.h.b16 %v229
    %v897 = vunpack.c.l.b16 %v230
    %v898 = vunpack.c.h.b16 %v230
    %v899 = vunpack.c.l.b16 %v231
    %v900 = vunpack.c.h.b16 %v231
    %v901 = vunpack.c.l.b16 %v232
    %v902 = vunpack.c.h.b16 %v232
    %v903 = vunpack.c.l.b16 %v233
    %v904 = vunpack.c.h.b16 %v233
    %v905 = vunpack.c.l.b16 %v234
    %v906 = vunpack.c.h.b16 %v234
    %v907 = vunpack.c.l.b16 %v235
    %v908 = vunpack.c.h.b16 %v235
    %v909 = vunpack.c.l.b16 %v236
    %v910 = vunpack.c.h.b16 %v236
    %v911 = vunpack.c.l.b16 %v237
    %v912 = vunpack.c.h.b16 %v237
    %v913 = vunpack.c.l.b16 %v238
    %v914 = vunpack.c.h.b16 %v238
    %v915 = vunpack.c.l.b16 %v239
    %v916 = vunpack.c.h.b16 %v239
    %v917 = vunpack.c.l.b16 %v240
    %v918 = vunpack.c.h.b16 %v240
    %v919 = vunpack.c.l.b16 %v241
    %v920 = vunpack.c.h.b16 %v241
    %v921 = vunpack.c.l.b16 %v242
    %v922 = vunpack.c.h.b16 %v242
    %v923 = vunpack.c.l.b16 %v243
    %v924 = vunpack.c.h.b16 %v243
    %v925 = vunpack.c.l.b16 %v244
    %v926 = vunpack.c.h.b16 %v244
    %v927 = vunpack.c.l.b16 %v245
    %v928 = vunpack.c.h.b16 %v245
    %v929 = vunpack.c.l.b16 %v246
    %v930 = vunpack.c.h.b16 %v246
    %v931 = vunpack.c.l.b16 %v247
    %v932 = vunpack.c.h.b16 %v247
    %v933 = vunpack.c.l.b16 %v248
    %v934 = vunpack.c.h.b16 %v248
    %v935 = vunpack.c.l.b16 %v249
    %v936 = vunpack.c.h.b16 %v249
    %v937 = vunpack.c.l.b16 %v250
    %v938 = vunpack.c.h.b16 %v250
    %v939 = vunpack.c.l.b16 %v251
    %v940 = vunpack.c.h.b16 %v251
    %v941 = vunpack.c.l.b16 %v252
    %v942 = vunpack.c.h.b16 %v252
    %v943 = vunpack.c.l.b16 %v253
    %v944 = vunpack.c.h.b16 %v253
    %v945 = vunpack.c.l.b16 %v254
    %v946 = vunpack.c.h.b16 %v254
    %v947 = vunpack.c.l.b16 %v255
    %v948 = vunpack.c.h.b16 %v255
    %v949 = vunpack.c.l.b16 %v256
    %v950 = vunpack.c.h.b16 %v256
    %v951 = vunpack.c.l.b16 %v257
    %v952 = vunpack.c.h.b16 %v257
    %v953 = vunpack.c.l.b16 %v258
    %v954 = vunpack.c.h.b16 %v258
    %v955 = vunpack.c.l.b16 %v259
    %v956 = vunpack.c.h.b16 %v259
    %v957 = vunpack.c.l.b16 %v260
    %v958 = vunpack.c.h.b16 %v260
    %v959 = vunpack.c.l.b16 %v261
    %v960 = vunpack.c.h.b16 %v261
    %v961 = vunpack.c.l.b16 %v262
    %v962 = vunpack.c.h.b16 %v262
    %v963 = vunpack.c.l.b16 %v263
    %v964 = vunpack.c.h.b16 %v263
    %v965 = vunpack.c.l.b16 %v264
    %v966 = vunpack.c.h.b16 %v264
    %v967 = vunpack.c.l.b16 %v265
    %v968 = vunpack.c.h.b16 %v265
    %v969 = vunpack.c.l.b16 %v266
    %v970 = vunpack.c.h.b16 %v266
    %v971 = vunpack.c.l.b16 %v267
    %v972 = vunpack.c.h.b16 %v267
    %v973 = vunpack.c.l.b16 %v268
    %v974 = vunpack.c.h.b16 %v268
    %v975 = vunpack.c.l.b16 %v269
    %v976 = vunpack.c.h.b16 %v269
    %v977 = vunpack.c.l.b16 %v270
    %v978 = vunpack.c.h.b16 %v270
    %v979 = vunpack.c.l.b16 %v271
    %v980 = vunpack.c.h.b16 %v271
    %v981 = vunpack.c.l.b16 %v272
    %v982 = vunpack.c.h.b16 %v272
    %v983 = vunpack.c.l.b16 %v273
    %v984 = vunpack.c.h.b16 %v273
    %v985 = vunpack.c.l.b16 %v274
    %v986 = vunpack.c.h.b16 %v274
    %v987 = vunpack.c.l.b16 %v275
    %v988 = vunpack.c.h.b16 %v275
    %v989 = vunpack.c.l.b16 %v276
    %v990 = vunpack.c.h.b16 %v276
    %v991 = vunpack.c.l.b16 %v277
    %v992 = vunpack.c.h.b16 %v277
    %v993 = vunpack.c.l.b16 %v278
    %v994 = vunpack.c.h.b16 %v278
    %v995 = vunpack.c.l.b16 %v279
    %v996 = vunpack.c.h.b16 %v279
    %v997 = vunpack.c.l.b16 %v280
    %v998 = vunpack.c.h.b16 %v280
    %v999 = vunpack.c.l.b16 %v281
    %v1000 = vunpack.c.h.b16 %v281
    %v1001 = vunpack.c.l.b16 %v282
    %v1002 = vunpack.c.h.b16 %v282
    %v1003 = vunpack.c.l.b16 %v283
    %v1004 = vunpack.c.h.b16 %v283
    %v1005 = vunpack.c.l.b16 %v284
    %v1006 = vunpack.c.h.b16 %v284
    %v1007 = vunpack.c.l.b16 %v285
    %v1008 = vunpack.c.h.b16 %v285
    %v1009 = vunpack.c.l.b16 %v286
    %v1010 = vunpack.c.h.b16 %v286
    %v1011 = vunpack.c.l.b16 %v287
    %v1012 = vunpack.c.h.b16 %v287
    %v1013 = vunpack.c.l.b16 %v288
    %v1014 = vunpack.c.h.b16 %v288
    %v1015 = vunpack.c.l.b16 %v289
    %v1016 = vunpack.c.h.b16 %v289
    %v1017 = vunpack.c.l.b16 %v290
    %v1018 = vunpack.c.h.b16 %v290
    %v1019 = vunpack.c.l.b16 %v291
    %v1020 = vunpack.c.h.b16 %v291
    %v1021 = vunpack.c.l.b16 %v292
    %v1022 = vunpack.c.h.b16 %v292
    %v1023 = vpack.c.b16 %v579, %v575
    %v1024 = vpack.c.b16 %v580, %v576
    %v1025 = vpack.c.b16 %v581, %v577
    %v1026 = vpack.c.b16 %v582, %v578
    %v1027 = vpack.c.b16 %v587, %v583
    %v1028 = vpack.c.b16 %v588, %v584
    %v1029 = vpack.c.b16 %v589, %v585
    %v1030 = vpack.c.b16 %v590, %v586
    %v1031 = vpack.c.b16 %v595, %v591
    %v1032 = vpack.c.b16 %v596, %v592
    %v1033 = vpack.c.b16 %v597, %v593
    %v1034 = vpack.c.b16 %v598, %v594
    %v1035 = vpack.c.b16 %v603, %v599
    %v1036 = vpack.c.b16 %v604, %v600
    %v1037 = vpack.c.b16 %v605, %v601
    %v1038 = vpack.c.b16 %v606, %v602
    %v1039 = vpack.c.b16 %v611, %v607
    %v1040 = vpack.c.b16 %v612, %v608
    %v1041 = vpack.c.b16 %v613, %v609
    %v1042 = vpack.c.b16 %v614, %v610
    %v1043 = vpack.c.b16 %v619, %v615
    %v1044 = vpack.c.b16 %v620, %v616
    %v1045 = vpack.c.b16 %v621, %v617
    %v1046 = vpack.c.b16 %v622, %v618
    %v1047 = vpack.c.b16 %v627, %v623
    %v1048 = vpack.c.b16 %v628, %v624
    %v1049 = vpack.c.b16 %v629, %v625
    %v1050 = vpack.c.b16 %v630, %v626
    %v1051 = vpack.c.b16 %v635, %v631
    %v1052 = vpack.c.b16 %v636, %v632
    %v1053 = vpack.c.b16 %v637, %v633
    %v1054 = vpack.c.b16 %v638, %v634
    %v1055 = vpack.c.b16 %v643, %v639
    %v1056 = vpack.c.b16 %v644, %v640
    %v1057 = vpack.c.b16 %v645, %v641
    %v1058 = vpack.c.b16 %v646, %v642
    %v1059 = vpack.c.b16 %v651, %v647
    %v1060 = vpack.c.b16 %v652, %v648
    %v1061 = vpack.c.b16 %v653, %v649
    %v1062 = vpack.c.b16 %v654, %v650
    %v1063 = vpack.c.b16 %v659, %v655
    %v1064 = vpack.c.b16 %v660, %v656
    %v1065 = vpack.c.b16 %v661, %v657
    %v1066 = vpack.c.b16 %v662, %v658
    %v1067 = vpack.c.b16 %v667, %v663
    %v1068 = vpack.c.b16 %v668, %v664
    %v1069 = vpack.c.b16 %v669, %v665
    %v1070 = vpack.c.b16 %v670, %v666
    %v1071 = vpack.c.b16 %v675, %v671
    %v1072 = vpack.c.b16 %v676, %v672
    %v1073 = vpack.c.b16 %v677, %v673
    %v1074 = vpack.c.b16 %v678, %v674
    %v1075 = vpack.c.b16 %v683, %v679
    %v1076 = vpack.c.b16 %v684, %v680
    %v1077 = vpack.c.b16 %v685, %v681
    %v1078 = vpack.c.b16 %v686, %v682
    %v1079 = vpack.c.b16 %v691, %v687
    %v1080 = vpack.c.b16 %v692, %v688
    %v1081 = vpack.c.b16 %v693, %v689
    %v1082 = vpack.c.b16 %v694, %v690
    %v1083 = vpack.c.b16 %v699, %v695
    %v1084 = vpack.c.b16 %v700, %v696
    %v1085 = vpack.c.b16 %v701, %v697
    %v1086 = vpack.c.b16 %v702, %v698
    %v1087 = vpack.c.b16 %v707, %v703
    %v1088 = vpack.c.b16 %v708, %v704
    %v1089 = vpack.c.b16 %v709, %v705
    %v1090 = vpack.c.b16 %v710, %v706
    %v1091 = vpack.c.b16 %v715, %v711
    %v1092 = vpack.c.b16 %v716, %v712
    %v1093 = vpack.c.b16 %v717, %v713
    %v1094 = vpack.c.b16 %v718, %v714
    %v1095 = vpack.c.b16 %v723, %v719
    %v1096 = vpack.c.b16 %v724, %v720
    %v1097 = vpack.c.b16 %v725, %v721
    %v1098 = vpack.c.b16 %v726, %v722
    %v1099 = vpack.c.b16 %v731, %v727
    %v1100 = vpack.c.b16 %v732, %v728
    %v1101 = vpack.c.b16 %v733, %v729
    %v1102 = vpack.c.b16 %v734, %v730
    %v1103 = vpack.c.b16 %v739, %v735
    %v1104 = vpack.c.b16 %v740, %v736
    %v1105 = vpack.c.b16 %v741, %v737
    %v1106 = vpack.c.b16 %v742, %v738
    %v1107 = vpack.c.b16 %v747, %v743
    %v1108 = vpack.c.b16 %v748, %v744
    %v1109 = vpack.c.b16 %v749, %v745
    %v1110 = vpack.c.b16 %v750, %v746
    %v1111 = vpack.c.b16 %v755, %v751
    %v1112 = vpack.c.b16 %v756, %v752
    %v1113 = vpack.c.b16 %v757, %v753
    %v1114 = vpack.c.b16 %v758, %v754
    %v1115 = vpack.c.b16 %v763, %v759
    %v1116 = vpack.c.b16 %v764, %v760
    %v1117 = vpack.c.b16 %v765, %v761
    %v1118 = vpack.c.b16 %v766, %v762
    %v1119 = vpack.c.b16 %v771, %v767
    %v1120 = vpack.c.b16 %v772, %v768
    %v1121 = vpack.c.b16 %v773, %v769
    %v1122 = vpack.c.b16 %v774, %v770
    %v1123 = vpack.c.b16 %v779, %v775
    %v1124 = vpack.c.b16 %v780, %v776
    %v1125 = vpack.c.b16 %v781, %v777
    %v1126 = vpack.c.b16 %v782, %v778
    %v1127 = vpack.c.b16 %v787, %v783
    %v1128 = vpack.c.b16 %v788, %v784
    %v1129 = vpack.c.b16 %v789, %v785
    %v1130 = vpack.c.b16 %v790, %v786
    %v1131 = vpack.c.b16 %v795, %v791
    %v1132 = vpack.c.b16 %v796, %v792
    %v1133 = vpack.c.b16 %v797, %v793
    %v1134 = vpack.c.b16 %v798, %v794
    %v1135 = vpack.c.b16 %v803, %v799
    %v1136 = vpack.c.b16 %v804, %v800
    %v1137 = vpack.c.b16 %v805, %v801
    %v1138 = vpack.c.b16 %v806, %v802
    %v1139 = vpack.c.b16 %v811, %v807
    %v1140 = vpack.c.b16 %v812, %v808
    %v1141 = vpack.c.b16 %v813, %v809
    %v1142 = vpack.c.b16 %v814, %v810
    %v1143 = vpack.c.b16 %v819, %v815
    %v1144 = vpack.c.b16 %v820, %v816
    %v1145 = vpack.c.b16 %v821, %v817
    %v1146 = vpack.c.b16 %v822, %v818
    %v1147 = vpack.c.b16 %v827, %v823
    %v1148 = vpack.c.b16 %v828, %v824
    %v1149 = vpack.c.b16 %v829, %v825
    %v1150 = vpack.c.b16 %v830, %v826
    %v1151 = vpack.c.b16 %v835, %v831
    %v1152 = vpack.c.b16 %v836, %v832
    %v1153 = vpack.c.b16 %v837, %v833
    %v1154 = vpack.c.b16 %v838, %v834
    %v1155 = vpack.c.b16 %v843, %v839
    %v1156 = vpack.c.b16 %v844, %v840
    %v1157 = vpack.c.b16 %v845, %v841
    %v1158 = vpack.c.b16 %v846, %v842
    %v1159 = vpack.c.b16 %v851, %v847
    %v1160 = vpack.c.b16 %v852, %v848
    %v1161 = vpack.c.b16 %v853, %v849
    %v1162 = vpack.c.b16 %v854, %v850
    %v1163 = vpack.c.b16 %v859, %v855
    %v1164 = vpack.c.b16 %v860, %v856
    %v1165 = vpack.c.b16 %v861, %v857
    %v1166 = vpack.c.b16 %v862, %v858
    %v1167 = vpack.c.b16 %v867, %v863
    %v1168 = vpack.c.b16 %v868, %v864
    %v1169 = vpack.c.b16 %v869, %v865
    %v1170 = vpack.c.b16 %v870, %v866
    %v1171 = vpack.c.b16 %v875, %v871
    %v1172 = vpack.c.b16 %v876, %v872
    %v1173 = vpack.c.b16 %v877, %v873
    %v1174 = vpack.c.b16 %v878, %v874
    %v1175 = vpack.c.b16 %v883, %v879
    %v1176 = vpack.c.b16 %v884, %v880
    %v1177 = vpack.c.b16 %v885, %v881
    %v1178 = vpack.c.b16 %v886, %v882
    %v1179 = vpack.c.b16 %v891, %v887
    %v1180 = vpack.c.b16 %v892, %v888
    %v1181 = vpack.c.b16 %v893, %v889
    %v1182 = vpack.c.b16 %v894, %v890
    %v1183 = vpack.c.b16 %v899, %v895
    %v1184 = vpack.c.b16 %v900, %v896
    %v1185 = vpack.c.b16 %v901, %v897
    %v1186 = vpack.c.b16 %v902, %v898
    %v1187 = vpack.c.b16 %v907, %v903
    %v1188 = vpack.c.b16 %v908, %v904
    %v1189 = vpack.c.b16 %v909, %v905
    %v1190 = vpack.c.b16 %v910, %v906
    %v1191 = vpack.c.b16 %v915, %v911
    %v1192 = vpack.c.b16 %v916, %v912
    %v1193 = vpack.c.b16 %v917, %v913
    %v1194 = vpack.c.b16 %v918, %v914
    %v1195 = vpack.c.b16 %v923, %v919
    %v1196 = vpack.c.b16 %v924, %v920
    %v1197 = vpack.c.b16 %v925, %v921
    %v1198 = vpack.c.b16 %v926, %v922
    %v1199 = vpack.c.b16 %v931, %v927
    %v1200 = vpack.c.b16 %v932, %v928
    %v1201 = vpack.c.b16 %v933, %v929
    %v1202 = vpack.c.b16 %v934, %v930
    %v1203 = vpack.c.b16 %v939, %v935
    %v1204 = vpack.c.b16 %v940, %v936
    %v1205 = vpack.c.b16 %v941, %v937
    %v1206 = vpack.c.b16 %v942, %v938
    %v1207 = vpack.c.b16 %v947, %v943
    %v1208 = vpack.c.b16 %v948, %v944
    %v1209 = vpack.c.b16 %v949, %v945
    %v1210 = vpack.c.b16 %v950, %v946
    %v1211 = vpack.c.b16 %v955, %v951
    %v1212 = vpack.c.b16 %v956, %v952
    %v1213 = vpack.c.b16 %v957, %v953
    %v1214 = vpack.c.b16 %v958, %v954
    %v1215 = vpack.c.b16 %v963, %v959
    %v1216 = vpack.c.b16 %v964, %v960
    %v1217 = vpack.c.b16 %v965, %v961
    %v1218 = vpack.c.b16 %v966, %v962
    %v1219 = vpack.c.b16 %v971, %v967
    %v1220 = vpack.c.b16 %v972, %v968
    %v1221 = vpack.c.b16 %v973, %v969
    %v1222 = vpack.c.b16 %v974, %v970
    %v1223 = vpack.c.b16 %v979, %v975
    %v1224 = vpack.c.b16 %v980, %v976
    %v1225 = vpack.c.b16 %v981, %v977
    %v1226 = vpack.c.b16 %v982, %v978
    %v1227 = vpack.c.b16 %v987, %v983
    %v1228 = vpack.c.b16 %v988, %v984
    %v1229 = vpack.c.b16 %v989, %v985
    %v1230 = vpack.c.b16 %v990, %v986
    %v1231 = vpack.c.b16 %v995, %v991
    %v1232 = vpack.c.b16 %v996, %v992
    %v1233 = vpack.c.b16 %v997, %v993
    %v1234 = vpack.c.b16 %v998, %v994
    %v1235 = vpack.c.b16 %v1003, %v999
    %v1236 = vpack.c.b16 %v1004, %v1000
    %v1237 = vpack.c.b16 %v1005, %v1001
    %v1238 = vpack.c.b16 %v1006, %v1002
    %v1239 = vpack.c.b16 %v1011, %v1007
    %v1240 = vpack.c.b16 %v1012, %v1008
    %v1241 = vpack.c.b16 %v1013, %v1009
    %v1242 = vpack.c.b16 %v1014, %v1010
    %v1243 = vpack.c.b16 %v1019, %v1015
    %v1244 = vpack.c.b16 %v1020, %v1016
    %v1245 = vpack.c.b16 %v1021, %v1017
    %v1246 = vpack.c.b16 %v1022, %v1018
    %1471 = vmatprep.subr.bf16.mxu0 %v1052
    %1472 = vmatpush1.bf16.msra.mxu0 %v1051
    %1473 = vmatprep.subr.bf16.mxu0 %v1048
    %1474 = vmatpush1.bf16.msra.mxu0 %v1047
    %1475 = vmatprep.subr.bf16.mxu0 %v1044
    %1476 = vmatpush1.bf16.msra.mxu0 %v1043
    %1477 = vmatprep.subr.bf16.mxu0 %v1040
    %1478 = vmatpush1.bf16.msra.mxu0 %v1039
    %1479 = vmatprep.subr.bf16.mxu0 %v1036
    %1480 = vmatpush1.bf16.msra.mxu0 %v1035
    %1481 = vmatprep.subr.bf16.mxu0 %v1032
    %1482 = vmatpush1.bf16.msra.mxu0 %v1031
    %1483 = vmatprep.subr.bf16.mxu0 %v1028
    %1484 = vmatpush1.bf16.msra.mxu0 %v1027
    %1485 = vmatprep.subr.bf16.mxu0 %v1024
    %1486 = vmatpush1.bf16.msra.mxu0 %v1023
    %1487 = vmatprep.subr.bf16.mxu0 %v1084
    %1488 = vmatpush2.bf16.msra.mxu0 %v1083
    %1489 = vmatprep.subr.bf16.mxu0 %v1080
    %1490 = vmatpush2.bf16.msra.mxu0 %v1079
    %1491 = vmatprep.subr.bf16.mxu0 %v1076
    %1492 = vmatpush2.bf16.msra.mxu0 %v1075
    %1493 = vmatprep.subr.bf16.mxu0 %v1072
    %1494 = vmatpush2.bf16.msra.mxu0 %v1071
    %1495 = vmatprep.subr.bf16.mxu0 %v1068
    %1496 = vmatpush2.bf16.msra.mxu0 %v1067
    %1497 = vmatprep.subr.bf16.mxu0 %v1064
    %1498 = vmatpush2.bf16.msra.mxu0 %v1063
    %1499 = vmatprep.subr.bf16.mxu0 %v1060
    %1500 = vmatpush2.bf16.msra.mxu0 %v1059
    %1501 = vmatprep.subr.bf16.mxu0 %v1056
    %1502 = vmatpush2.bf16.msra.mxu0 %v1055
    %1503 = vmatprep.mubr.bf16.mxu0 %v338
    %1504 = vmatmul.mubr.bf16.gmra.mxu0 %v337
    %v1505 = vpop.f32.mrf.mxu0
    %v1506 = vadd.f32 %v298, %v1505
    %v1507 = vpop.f32.mrf.mxu0
    %v1508 = vadd.f32 %v302, %v1507
    %v1509 = vpop.f32.mrf.mxu0
    %v1510 = vadd.f32 %v298, %v1509
    %v1511 = vpop.f32.mrf.mxu0
    %v1512 = vadd.f32 %v302, %v1511
    %1513 = vdwg.mxu0
    %1514 = vmatprep.subr.bf16.mxu0 %v1116
    %1515 = vmatpush1.bf16.msra.mxu0 %v1115
    %1516 = vmatprep.subr.bf16.mxu0 %v1112
    %1517 = vmatpush1.bf16.msra.mxu0 %v1111
    %1518 = vmatprep.subr.bf16.mxu0 %v1108
    %1519 = vmatpush1.bf16.msra.mxu0 %v1107
    %1520 = vmatprep.subr.bf16.mxu0 %v1104
    %1521 = vmatpush1.bf16.msra.mxu0 %v1103
    %1522 = vmatprep.subr.bf16.mxu0 %v1100
    %1523 = vmatpush1.bf16.msra.mxu0 %v1099
    %1524 = vmatprep.subr.bf16.mxu0 %v1096
    %1525 = vmatpush1.bf16.msra.mxu0 %v1095
    %1526 = vmatprep.subr.bf16.mxu0 %v1092
    %1527 = vmatpush1.bf16.msra.mxu0 %v1091
    %1528 = vmatprep.subr.bf16.mxu0 %v1088
    %1529 = vmatpush1.bf16.msra.mxu0 %v1087
    %1530 = vmatprep.subr.bf16.mxu0 %v1148
    %1531 = vmatpush2.bf16.msra.mxu0 %v1147
    %1532 = vmatprep.subr.bf16.mxu0 %v1144
    %1533 = vmatpush2.bf16.msra.mxu0 %v1143
    %1534 = vmatprep.subr.bf16.mxu0 %v1140
    %1535 = vmatpush2.bf16.msra.mxu0 %v1139
    %1536 = vmatprep.subr.bf16.mxu0 %v1136
    %1537 = vmatpush2.bf16.msra.mxu0 %v1135
    %1538 = vmatprep.subr.bf16.mxu0 %v1132
    %1539 = vmatpush2.bf16.msra.mxu0 %v1131
    %1540 = vmatprep.subr.bf16.mxu0 %v1128
    %1541 = vmatpush2.bf16.msra.mxu0 %v1127
    %1542 = vmatprep.subr.bf16.mxu0 %v1124
    %1543 = vmatpush2.bf16.msra.mxu0 %v1123
    %1544 = vmatprep.subr.bf16.mxu0 %v1120
    %1545 = vmatpush2.bf16.msra.mxu0 %v1119
    %1546 = vmatprep.mubr.bf16.mxu0 %v340
    %1547 = vmatmul.mubr.bf16.gmra.mxu0 %v339
    %v1548 = vpop.f32.mrf.mxu0
    %v1549 = vadd.f32 %v1506, %v1548
    %v1550 = vpop.f32.mrf.mxu0
    %v1551 = vadd.f32 %v1508, %v1550
    %v1552 = vpop.f32.mrf.mxu0
    %v1553 = vadd.f32 %v1510, %v1552
    %v1554 = vpop.f32.mrf.mxu0
    %v1555 = vadd.f32 %v1512, %v1554
    %1556 = vdwg.mxu0
    %1557 = vmatprep.subr.bf16.mxu0 %v1180
    %1558 = vmatpush1.bf16.msra.mxu0 %v1179
    %1559 = vmatprep.subr.bf16.mxu0 %v1176
    %1560 = vmatpush1.bf16.msra.mxu0 %v1175
    %1561 = vmatprep.subr.bf16.mxu0 %v1172
    %1562 = vmatpush1.bf16.msra.mxu0 %v1171
    %1563 = vmatprep.subr.bf16.mxu0 %v1168
    %1564 = vmatpush1.bf16.msra.mxu0 %v1167
    %1565 = vmatprep.subr.bf16.mxu0 %v1164
    %1566 = vmatpush1.bf16.msra.mxu0 %v1163
    %1567 = vmatprep.subr.bf16.mxu0 %v1160
    %1568 = vmatpush1.bf16.msra.mxu0 %v1159
    %1569 = vmatprep.subr.bf16.mxu0 %v1156
    %1570 = vmatpush1.bf16.msra.mxu0 %v1155
    %1571 = vmatprep.subr.bf16.mxu0 %v1152
    %1572 = vmatpush1.bf16.msra.mxu0 %v1151
    %1573 = vmatprep.subr.bf16.mxu0 %v1212
    %1574 = vmatpush2.bf16.msra.mxu0 %v1211
    %1575 = vmatprep.subr.bf16.mxu0 %v1208
    %1576 = vmatpush2.bf16.msra.mxu0 %v1207
    %1577 = vmatprep.subr.bf16.mxu0 %v1204
    %1578 = vmatpush2.bf16.msra.mxu0 %v1203
    %1579 = vmatprep.subr.bf16.mxu0 %v1200
    %1580 = vmatpush2.bf16.msra.mxu0 %v1199
    %1581 = vmatprep.subr.bf16.mxu0 %v1196
    %1582 = vmatpush2.bf16.msra.mxu0 %v1195
    %1583 = vmatprep.subr.bf16.mxu0 %v1192
    %1584 = vmatpush2.bf16.msra.mxu0 %v1191
    %1585 = vmatprep.subr.bf16.mxu0 %v1188
    %1586 = vmatpush2.bf16.msra.mxu0 %v1187
    %1587 = vmatprep.subr.bf16.mxu0 %v1184
    %1588 = vmatpush2.bf16.msra.mxu0 %v1183
    %1589 = vmatprep.mubr.bf16.mxu0 %v342
    %1590 = vmatmul.mubr.bf16.gmra.mxu0 %v341
    %v1591 = vpop.f32.mrf.mxu0
    %v1592 = vadd.f32 %v1549, %v1591
    %v1593 = vpop.f32.mrf.mxu0
    %v1594 = vadd.f32 %v1551, %v1593
    %v1595 = vpop.f32.mrf.mxu0
    %v1596 = vadd.f32 %v1553, %v1595
    %v1597 = vpop.f32.mrf.mxu0
    %v1598 = vadd.f32 %v1555, %v1597
    %1599 = vdwg.mxu0
    %1600 = vmatprep.subr.bf16.mxu0 %v1244
    %1601 = vmatpush1.bf16.msra.mxu0 %v1243
    %1602 = vmatprep.subr.bf16.mxu0 %v1240
    %1603 = vmatpush1.bf16.msra.mxu0 %v1239
    %1604 = vmatprep.subr.bf16.mxu0 %v1236
    %1605 = vmatpush1.bf16.msra.mxu0 %v1235
    %1606 = vmatprep.subr.bf16.mxu0 %v1232
    %1607 = vmatpush1.bf16.msra.mxu0 %v1231
    %1608 = vmatprep.subr.bf16.mxu0 %v1228
    %1609 = vmatpush1.bf16.msra.mxu0 %v1227
    %1610 = vmatprep.subr.bf16.mxu0 %v1224
    %1611 = vmatpush1.bf16.msra.mxu0 %v1223
    %1612 = vmatprep.subr.bf16.mxu0 %v1220
    %1613 = vmatpush1.bf16.msra.mxu0 %v1219
    %1614 = vmatprep.subr.bf16.mxu0 %v1216
    %1615 = vmatpush1.bf16.msra.mxu0 %v1215
    %1616 = vmatprep.subr.bf16.mxu0 0
    %1617 = vmatpush2.bf16.msra.mxu0 0
    %1618 = vmatprep.subr.bf16.mxu0 0
    %1619 = vmatpush2.bf16.msra.mxu0 0
    %1620 = vmatprep.subr.bf16.mxu0 0
    %1621 = vmatpush2.bf16.msra.mxu0 0
    %1622 = vmatprep.subr.bf16.mxu0 0
    %1623 = vmatpush2.bf16.msra.mxu0 0
    %1624 = vmatprep.subr.bf16.mxu0 0
    %1625 = vmatpush2.bf16.msra.mxu0 0
    %1626 = vmatprep.subr.bf16.mxu0 0
    %1627 = vmatpush2.bf16.msra.mxu0 0
    %1628 = vmatprep.subr.bf16.mxu0 0
    %1629 = vmatpush2.bf16.msra.mxu0 0
    %1630 = vmatprep.subr.bf16.mxu0 0
    %1631 = vmatpush2.bf16.msra.mxu0 0
    %1632 = vmatprep.mubr.bf16.mxu0 0
    %1633 = vmatmul.mubr.bf16.gmra.mxu0 %v343
    %v1634 = vpop.f32.mrf.mxu0
    %v1635 = vadd.f32 %v1592, %v1634
    %v1636 = vpop.f32.mrf.mxu0
    %v1637 = vadd.f32 %v1594, %v1636
    %v1638 = vpop.f32.mrf.mxu0
    %v1639 = vadd.f32 %v1596, %v1638
    %v1640 = vpop.f32.mrf.mxu0
    %v1641 = vadd.f32 %v1598, %v1640
    %1642 = vdwg.mxu0
    %1643 = vmatprep.subr.bf16.mxu0 %v1054
    %1644 = vmatpush1.bf16.msra.mxu0 %v1053
    %1645 = vmatprep.subr.bf16.mxu0 %v1050
    %1646 = vmatpush1.bf16.msra.mxu0 %v1049
    %1647 = vmatprep.subr.bf16.mxu0 %v1046
    %1648 = vmatpush1.bf16.msra.mxu0 %v1045
    %1649 = vmatprep.subr.bf16.mxu0 %v1042
    %1650 = vmatpush1.bf16.msra.mxu0 %v1041
    %1651 = vmatprep.subr.bf16.mxu0 %v1038
    %1652 = vmatpush1.bf16.msra.mxu0 %v1037
    %1653 = vmatprep.subr.bf16.mxu0 %v1034
    %1654 = vmatpush1.bf16.msra.mxu0 %v1033
    %1655 = vmatprep.subr.bf16.mxu0 %v1030
    %1656 = vmatpush1.bf16.msra.mxu0 %v1029
    %1657 = vmatprep.subr.bf16.mxu0 %v1026
    %1658 = vmatpush1.bf16.msra.mxu0 %v1025
    %1659 = vmatprep.subr.bf16.mxu0 %v1086
    %1660 = vmatpush2.bf16.msra.mxu0 %v1085
    %1661 = vmatprep.subr.bf16.mxu0 %v1082
    %1662 = vmatpush2.bf16.msra.mxu0 %v1081
    %1663 = vmatprep.subr.bf16.mxu0 %v1078
    %1664 = vmatpush2.bf16.msra.mxu0 %v1077
    %1665 = vmatprep.subr.bf16.mxu0 %v1074
    %1666 = vmatpush2.bf16.msra.mxu0 %v1073
    %1667 = vmatprep.subr.bf16.mxu0 %v1070
    %1668 = vmatpush2.bf16.msra.mxu0 %v1069
    %1669 = vmatprep.subr.bf16.mxu0 %v1066
    %1670 = vmatpush2.bf16.msra.mxu0 %v1065
    %1671 = vmatprep.subr.bf16.mxu0 %v1062
    %1672 = vmatpush2.bf16.msra.mxu0 %v1061
    %1673 = vmatprep.subr.bf16.mxu0 %v1058
    %1674 = vmatpush2.bf16.msra.mxu0 %v1057
    %1675 = vmatprep.mubr.bf16.mxu0 %v338
    %1676 = vmatmul.mubr.bf16.gmra.mxu0 %v337
    %v1677 = vpop.f32.mrf.mxu0
    %v1678 = vadd.f32 %v306, %v1677
    %v1679 = vpop.f32.mrf.mxu0
    %v1680 = vadd.f32 %v310, %v1679
    %v1681 = vpop.f32.mrf.mxu0
    %v1682 = vadd.f32 %v306, %v1681
    %v1683 = vpop.f32.mrf.mxu0
    %v1684 = vadd.f32 %v310, %v1683
    %1685 = vdwg.mxu0
    %1686 = vmatprep.subr.bf16.mxu0 %v1118
    %1687 = vmatpush1.bf16.msra.mxu0 %v1117
    %1688 = vmatprep.subr.bf16.mxu0 %v1114
    %1689 = vmatpush1.bf16.msra.mxu0 %v1113
    %1690 = vmatprep.subr.bf16.mxu0 %v1110
    %1691 = vmatpush1.bf16.msra.mxu0 %v1109
    %1692 = vmatprep.subr.bf16.mxu0 %v1106
    %1693 = vmatpush1.bf16.msra.mxu0 %v1105
    %1694 = vmatprep.subr.bf16.mxu0 %v1102
    %1695 = vmatpush1.bf16.msra.mxu0 %v1101
    %1696 = vmatprep.subr.bf16.mxu0 %v1098
    %1697 = vmatpush1.bf16.msra.mxu0 %v1097
    %1698 = vmatprep.subr.bf16.mxu0 %v1094
    %1699 = vmatpush1.bf16.msra.mxu0 %v1093
    %1700 = vmatprep.subr.bf16.mxu0 %v1090
    %1701 = vmatpush1.bf16.msra.mxu0 %v1089
    %1702 = vmatprep.subr.bf16.mxu0 %v1150
    %1703 = vmatpush2.bf16.msra.mxu0 %v1149
    %1704 = vmatprep.subr.bf16.mxu0 %v1146
    %1705 = vmatpush2.bf16.msra.mxu0 %v1145
    %1706 = vmatprep.subr.bf16.mxu0 %v1142
    %1707 = vmatpush2.bf16.msra.mxu0 %v1141
    %1708 = vmatprep.subr.bf16.mxu0 %v1138
    %1709 = vmatpush2.bf16.msra.mxu0 %v1137
    %1710 = vmatprep.subr.bf16.mxu0 %v1134
    %1711 = vmatpush2.bf16.msra.mxu0 %v1133
    %1712 = vmatprep.subr.bf16.mxu0 %v1130
    %1713 = vmatpush2.bf16.msra.mxu0 %v1129
    %1714 = vmatprep.subr.bf16.mxu0 %v1126
    %1715 = vmatpush2.bf16.msra.mxu0 %v1125
    %1716 = vmatprep.subr.bf16.mxu0 %v1122
    %1717 = vmatpush2.bf16.msra.mxu0 %v1121
    %1718 = vmatprep.mubr.bf16.mxu0 %v340
    %1719 = vmatmul.mubr.bf16.gmra.mxu0 %v339
    %v1720 = vpop.f32.mrf.mxu0
    %v1721 = vadd.f32 %v1678, %v1720
    %v1722 = vpop.f32.mrf.mxu0
    %v1723 = vadd.f32 %v1680, %v1722
    %v1724 = vpop.f32.mrf.mxu0
    %v1725 = vadd.f32 %v1682, %v1724
    %v1726 = vpop.f32.mrf.mxu0
    %v1727 = vadd.f32 %v1684, %v1726
    %1728 = vdwg.mxu0
    %1729 = vmatprep.subr.bf16.mxu0 %v1182
    %1730 = vmatpush1.bf16.msra.mxu0 %v1181
    %1731 = vmatprep.subr.bf16.mxu0 %v1178
    %1732 = vmatpush1.bf16.msra.mxu0 %v1177
    %1733 = vmatprep.subr.bf16.mxu0 %v1174
    %1734 = vmatpush1.bf16.msra.mxu0 %v1173
    %1735 = vmatprep.subr.bf16.mxu0 %v1170
    %1736 = vmatpush1.bf16.msra.mxu0 %v1169
    %1737 = vmatprep.subr.bf16.mxu0 %v1166
    %1738 = vmatpush1.bf16.msra.mxu0 %v1165
    %1739 = vmatprep.subr.bf16.mxu0 %v1162
    %1740 = vmatpush1.bf16.msra.mxu0 %v1161
    %1741 = vmatprep.subr.bf16.mxu0 %v1158
    %1742 = vmatpush1.bf16.msra.mxu0 %v1157
    %1743 = vmatprep.subr.bf16.mxu0 %v1154
    %1744 = vmatpush1.bf16.msra.mxu0 %v1153
    %1745 = vmatprep.subr.bf16.mxu0 %v1214
    %1746 = vmatpush2.bf16.msra.mxu0 %v1213
    %1747 = vmatprep.subr.bf16.mxu0 %v1210
    %1748 = vmatpush2.bf16.msra.mxu0 %v1209
    %1749 = vmatprep.subr.bf16.mxu0 %v1206
    %1750 = vmatpush2.bf16.msra.mxu0 %v1205
    %1751 = vmatprep.subr.bf16.mxu0 %v1202
    %1752 = vmatpush2.bf16.msra.mxu0 %v1201
    %1753 = vmatprep.subr.bf16.mxu0 %v1198
    %1754 = vmatpush2.bf16.msra.mxu0 %v1197
    %1755 = vmatprep.subr.bf16.mxu0 %v1194
    %1756 = vmatpush2.bf16.msra.mxu0 %v1193
    %1757 = vmatprep.subr.bf16.mxu0 %v1190
    %1758 = vmatpush2.bf16.msra.mxu0 %v1189
    %1759 = vmatprep.subr.bf16.mxu0 %v1186
    %1760 = vmatpush2.bf16.msra.mxu0 %v1185
    %1761 = vmatprep.mubr.bf16.mxu0 %v342
    %1762 = vmatmul.mubr.bf16.gmra.mxu0 %v341
    %v1763 = vpop.f32.mrf.mxu0
    %v1764 = vadd.f32 %v1721, %v1763
    %v1765 = vpop.f32.mrf.mxu0
    %v1766 = vadd.f32 %v1723, %v1765
    %v1767 = vpop.f32.mrf.mxu0
    %v1768 = vadd.f32 %v1725, %v1767
    %v1769 = vpop.f32.mrf.mxu0
    %v1770 = vadd.f32 %v1727, %v1769
    %1771 = vdwg.mxu0
    %1772 = vmatprep.subr.bf16.mxu0 %v1246
    %1773 = vmatpush1.bf16.msra.mxu0 %v1245
    %1774 = vmatprep.subr.bf16.mxu0 %v1242
    %1775 = vmatpush1.bf16.msra.mxu0 %v1241
    %1776 = vmatprep.subr.bf16.mxu0 %v1238
    %1777 = vmatpush1.bf16.msra.mxu0 %v1237
    %1778 = vmatprep.subr.bf16.mxu0 %v1234
    %1779 = vmatpush1.bf16.msra.mxu0 %v1233
    %1780 = vmatprep.subr.bf16.mxu0 %v1230
    %1781 = vmatpush1.bf16.msra.mxu0 %v1229
    %1782 = vmatprep.subr.bf16.mxu0 %v1226
    %1783 = vmatpush1.bf16.msra.mxu0 %v1225
    %1784 = vmatprep.subr.bf16.mxu0 %v1222
    %1785 = vmatpush1.bf16.msra.mxu0 %v1221
    %1786 = vmatprep.subr.bf16.mxu0 %v1218
    %1787 = vmatpush1.bf16.msra.mxu0 %v1217
    %1788 = vmatprep.subr.bf16.mxu0 0
    %1789 = vmatpush2.bf16.msra.mxu0 0
    %1790 = vmatprep.subr.bf16.mxu0 0
    %1791 = vmatpush2.bf16.msra.mxu0 0
    %1792 = vmatprep.subr.bf16.mxu0 0
    %1793 = vmatpush2.bf16.msra.mxu0 0
    %1794 = vmatprep.subr.bf16.mxu0 0
    %1795 = vmatpush2.bf16.msra.mxu0 0
    %1796 = vmatprep.subr.bf16.mxu0 0
    %1797 = vmatpush2.bf16.msra.mxu0 0
    %1798 = vmatprep.subr.bf16.mxu0 0
    %1799 = vmatpush2.bf16.msra.mxu0 0
    %1800 = vmatprep.subr.bf16.mxu0 0
    %1801 = vmatpush2.bf16.msra.mxu0 0
    %1802 = vmatprep.subr.bf16.mxu0 0
    %1803 = vmatpush2.bf16.msra.mxu0 0
    %1804 = vmatprep.mubr.bf16.mxu0 0
    %1805 = vmatmul.mubr.bf16.gmra.mxu0 %v343
    %v1806 = vpop.f32.mrf.mxu0
    %v1807 = vadd.f32 %v1764, %v1806
    %v1808 = vpop.f32.mrf.mxu0
    %v1809 = vadd.f32 %v1766, %v1808
    %v1810 = vpop.f32.mrf.mxu0
    %v1811 = vadd.f32 %v1768, %v1810
    %v1812 = vpop.f32.mrf.mxu0
    %v1813 = vadd.f32 %v1770, %v1812
    %1814 = vdwg.mxu0
    %v1815 = vmax.f32 %v1635, 0.0
    %v1816 = vmax.f32 %v1637, 0.0
    %v1817 = vmax.f32 %v1807, 0.0
    %v1818 = vmax.f32 %v1809, 0.0
    %v1819 = vmax.f32 %v1639, 0.0
    %v1820 = vmax.f32 %v1641, 0.0
    %v1821 = vmax.f32 %v1811, 0.0
    %v1822 = vmax.f32 %v1813, 0.0
    %v1823 = vpack.c.bf16 %v1819, %v1815
    %v1824 = vpack.c.bf16 %v1820, %v1816
    %v1825 = vpack.c.bf16 %v1821, %v1817
    %v1826 = vpack.c.bf16 %v1822, %v1818
    %v1827 = vld [vmem:[%s3] sm:$0xff]
    %v1828 = vld [vmem:[%s3 + $0x8] sm:$0xff]
    %v1829 = vld [vmem:[%s3 + $0x10] sm:$0xff]
    %v1830 = vld [vmem:[%s3 + $0x18] sm:$0xff]
    %v1831 = vld [vmem:[%s3 + $0x20] sm:$0xff]
    %v1832 = vld [vmem:[%s3 + $0x28] sm:$0xff]
    %v1833 = vld [vmem:[%s3 + $0x30] sm:$0xff]
    %v1834 = vld [vmem:[%s3 + $0x38] sm:$0xff]
    %v1835 = vld [vmem:[%s3 + $0x40] sm:$0xff]
    %v1836 = vld [vmem:[%s3 + $0x48] sm:$0xff]
    %v1837 = vld [vmem:[%s3 + $0x50] sm:$0xff]
    %v1838 = vld [vmem:[%s3 + $0x58] sm:$0xff]
    %v1839 = vld [vmem:[%s3 + $0x60] sm:$0xff]
    %v1840 = vld [vmem:[%s3 + $0x68] sm:$0xff]
    %v1841 = vld [vmem:[%s3 + $0x70] sm:$0xff]
    %v1842 = vld [vmem:[%s3 + $0x78] sm:$0xff]
    %v1843 = vld [vmem:[%s3 + $0x80] sm:$0xff]
    %v1844 = vld [vmem:[%s3 + $0x88] sm:$0xff]
    %v1845 = vld [vmem:[%s3 + $0x90] sm:$0xff]
    %v1846 = vld [vmem:[%s3 + $0x98] sm:$0xff]
    %v1847 = vld [vmem:[%s3 + $0xa0] sm:$0xff]
    %v1848 = vld [vmem:[%s3 + $0xa8] sm:$0xff]
    %v1849 = vld [vmem:[%s3 + $0xb0] sm:$0xff]
    %v1850 = vld [vmem:[%s3 + $0xb8] sm:$0xff]
    %v1851 = vld [vmem:[%s3 + $0xc0] sm:$0xff]
    %v1852 = vld [vmem:[%s3 + $0xc8] sm:$0xff]
    %v1853 = vld [vmem:[%s3 + $0xd0] sm:$0xff]
    %v1854 = vld [vmem:[%s3 + $0xd8] sm:$0xff]
    %v1855 = vld [vmem:[%s3 + $0xe0] sm:$0xff]
    %v1856 = vld [vmem:[%s3 + $0xe8] sm:$0xff]
    %v1857 = vld [vmem:[%s3 + $0xf0] sm:$0xff]
    %v1858 = vld [vmem:[%s3 + $0xf8] sm:$0xff]
    %v1859 = vld [vmem:[%s3 + $0x100] sm:$0xff]
    %v1860 = vld [vmem:[%s3 + $0x108] sm:$0xff]
    %v1861 = vld [vmem:[%s3 + $0x110] sm:$0xff]
    %v1862 = vld [vmem:[%s3 + $0x118] sm:$0xff]
    %v1863 = vld [vmem:[%s3 + $0x120] sm:$0xff]
    %v1864 = vld [vmem:[%s3 + $0x128] sm:$0xff]
    %v1865 = vld [vmem:[%s3 + $0x130] sm:$0xff]
    %v1866 = vld [vmem:[%s3 + $0x138] sm:$0xff]
    %v1867 = vld [vmem:[%s3 + $0x140] sm:$0xff]
    %v1868 = vld [vmem:[%s3 + $0x148] sm:$0xff]
    %v1869 = vld [vmem:[%s3 + $0x150] sm:$0xff]
    %v1870 = vld [vmem:[%s3 + $0x158] sm:$0xff]
    %v1871 = vld [vmem:[%s3 + $0x160] sm:$0xff]
    %v1872 = vld [vmem:[%s3 + $0x168] sm:$0xff]
    %v1873 = vld [vmem:[%s3 + $0x170] sm:$0xff]
    %v1874 = vld [vmem:[%s3 + $0x178] sm:$0xff]
    %v1875 = vld [vmem:[%s3 + $0x180] sm:$0xff]
    %v1876 = vld [vmem:[%s3 + $0x188] sm:$0xff]
    %v1877 = vld [vmem:[%s3 + $0x190] sm:$0xff]
    %v1878 = vld [vmem:[%s3 + $0x198] sm:$0xff]
    %v1879 = vld [vmem:[%s3 + $0x1a0] sm:$0xff]
    %v1880 = vld [vmem:[%s3 + $0x1a8] sm:$0xff]
    %v1881 = vld [vmem:[%s3 + $0x1b0] sm:$0xff]
    %v1882 = vld [vmem:[%s3 + $0x1b8] sm:$0xff]
    %v1883 = vld [vmem:[%s3 + $0x1c0] sm:$0xff]
    %v1884 = vld [vmem:[%s3 + $0x1c8] sm:$0xff]
    %v1885 = vld [vmem:[%s3 + $0x1d0] sm:$0xff]
    %v1886 = vld [vmem:[%s3 + $0x1d8] sm:$0xff]
    %v1887 = vld [vmem:[%s3 + $0x1e0] sm:$0xff]
    %v1888 = vld [vmem:[%s3 + $0x1e8] sm:$0xff]
    %v1889 = vld [vmem:[%s3 + $0x1f0] sm:$0xff]
    %v1890 = vld [vmem:[%s3 + $0x1f8] sm:$0xff]
    %v1891 = vld [vmem:[%s4] sm:$0x3]
    %v1893 = vlaneseq
    %v1894 = vshrl.u32 %v1893, 7
    %v1895 = vsub.s32 0, %v1894
    %v1896 = vrot.slane %v1891, %v1895
    %v1897 = vlaneseq
    %v1898 = vshrl.u32 %v1897, 7
    %v1899 = vsub.s32 1, %v1898
    %v1900 = vrot.slane %v1891, %v1899
    %v1967 = vunpack.c.l.b16 %v1827
    %v1968 = vunpack.c.h.b16 %v1827
    %v1969 = vunpack.c.l.b16 %v1828
    %v1970 = vunpack.c.h.b16 %v1828
    %v1971 = vunpack.c.l.b16 %v1829
    %v1972 = vunpack.c.h.b16 %v1829
    %v1973 = vunpack.c.l.b16 %v1830
    %v1974 = vunpack.c.h.b16 %v1830
    %v1975 = vunpack.c.l.b16 %v1831
    %v1976 = vunpack.c.h.b16 %v1831
    %v1977 = vunpack.c.l.b16 %v1832
    %v1978 = vunpack.c.h.b16 %v1832
    %v1979 = vunpack.c.l.b16 %v1833
    %v1980 = vunpack.c.h.b16 %v1833
    %v1981 = vunpack.c.l.b16 %v1834
    %v1982 = vunpack.c.h.b16 %v1834
    %v1983 = vunpack.c.l.b16 %v1835
    %v1984 = vunpack.c.h.b16 %v1835
    %v1985 = vunpack.c.l.b16 %v1836
    %v1986 = vunpack.c.h.b16 %v1836
    %v1987 = vunpack.c.l.b16 %v1837
    %v1988 = vunpack.c.h.b16 %v1837
    %v1989 = vunpack.c.l.b16 %v1838
    %v1990 = vunpack.c.h.b16 %v1838
    %v1991 = vunpack.c.l.b16 %v1839
    %v1992 = vunpack.c.h.b16 %v1839
    %v1993 = vunpack.c.l.b16 %v1840
    %v1994 = vunpack.c.h.b16 %v1840
    %v1995 = vunpack.c.l.b16 %v1841
    %v1996 = vunpack.c.h.b16 %v1841
    %v1997 = vunpack.c.l.b16 %v1842
    %v1998 = vunpack.c.h.b16 %v1842
    %v1999 = vunpack.c.l.b16 %v1843
    %v2000 = vunpack.c.h.b16 %v1843
    %v2001 = vunpack.c.l.b16 %v1844
    %v2002 = vunpack.c.h.b16 %v1844
    %v2003 = vunpack.c.l.b16 %v1845
    %v2004 = vunpack.c.h.b16 %v1845
    %v2005 = vunpack.c.l.b16 %v1846
    %v2006 = vunpack.c.h.b16 %v1846
    %v2007 = vunpack.c.l.b16 %v1847
    %v2008 = vunpack.c.h.b16 %v1847
    %v2009 = vunpack.c.l.b16 %v1848
    %v2010 = vunpack.c.h.b16 %v1848
    %v2011 = vunpack.c.l.b16 %v1849
    %v2012 = vunpack.c.h.b16 %v1849
    %v2013 = vunpack.c.l.b16 %v1850
    %v2014 = vunpack.c.h.b16 %v1850
    %v2015 = vunpack.c.l.b16 %v1851
    %v2016 = vunpack.c.h.b16 %v1851
    %v2017 = vunpack.c.l.b16 %v1852
    %v2018 = vunpack.c.h.b16 %v1852
    %v2019 = vunpack.c.l.b16 %v1853
    %v2020 = vunpack.c.h.b16 %v1853
    %v2021 = vunpack.c.l.b16 %v1854
    %v2022 = vunpack.c.h.b16 %v1854
    %v2023 = vunpack.c.l.b16 %v1855
    %v2024 = vunpack.c.h.b16 %v1855
    %v2025 = vunpack.c.l.b16 %v1856
    %v2026 = vunpack.c.h.b16 %v1856
    %v2027 = vunpack.c.l.b16 %v1857
    %v2028 = vunpack.c.h.b16 %v1857
    %v2029 = vunpack.c.l.b16 %v1858
    %v2030 = vunpack.c.h.b16 %v1858
    %v2031 = vunpack.c.l.b16 %v1859
    %v2032 = vunpack.c.h.b16 %v1859
    %v2033 = vunpack.c.l.b16 %v1860
    %v2034 = vunpack.c.h.b16 %v1860
    %v2035 = vunpack.c.l.b16 %v1861
    %v2036 = vunpack.c.h.b16 %v1861
    %v2037 = vunpack.c.l.b16 %v1862
    %v2038 = vunpack.c.h.b16 %v1862
    %v2039 = vunpack.c.l.b16 %v1863
    %v2040 = vunpack.c.h.b16 %v1863
    %v2041 = vunpack.c.l.b16 %v1864
    %v2042 = vunpack.c.h.b16 %v1864
    %v2043 = vunpack.c.l.b16 %v1865
    %v2044 = vunpack.c.h.b16 %v1865
    %v2045 = vunpack.c.l.b16 %v1866
    %v2046 = vunpack.c.h.b16 %v1866
    %v2047 = vunpack.c.l.b16 %v1867
    %v2048 = vunpack.c.h.b16 %v1867
    %v2049 = vunpack.c.l.b16 %v1868
    %v2050 = vunpack.c.h.b16 %v1868
    %v2051 = vunpack.c.l.b16 %v1869
    %v2052 = vunpack.c.h.b16 %v1869
    %v2053 = vunpack.c.l.b16 %v1870
    %v2054 = vunpack.c.h.b16 %v1870
    %v2055 = vunpack.c.l.b16 %v1871
    %v2056 = vunpack.c.h.b16 %v1871
    %v2057 = vunpack.c.l.b16 %v1872
    %v2058 = vunpack.c.h.b16 %v1872
    %v2059 = vunpack.c.l.b16 %v1873
    %v2060 = vunpack.c.h.b16 %v1873
    %v2061 = vunpack.c.l.b16 %v1874
    %v2062 = vunpack.c.h.b16 %v1874
    %v2063 = vunpack.c.l.b16 %v1875
    %v2064 = vunpack.c.h.b16 %v1875
    %v2065 = vunpack.c.l.b16 %v1876
    %v2066 = vunpack.c.h.b16 %v1876
    %v2067 = vunpack.c.l.b16 %v1877
    %v2068 = vunpack.c.h.b16 %v1877
    %v2069 = vunpack.c.l.b16 %v1878
    %v2070 = vunpack.c.h.b16 %v1878
    %v2071 = vunpack.c.l.b16 %v1879
    %v2072 = vunpack.c.h.b16 %v1879
    %v2073 = vunpack.c.l.b16 %v1880
    %v2074 = vunpack.c.h.b16 %v1880
    %v2075 = vunpack.c.l.b16 %v1881
    %v2076 = vunpack.c.h.b16 %v1881
    %v2077 = vunpack.c.l.b16 %v1882
    %v2078 = vunpack.c.h.b16 %v1882
    %v2079 = vunpack.c.l.b16 %v1883
    %v2080 = vunpack.c.h.b16 %v1883
    %v2081 = vunpack.c.l.b16 %v1884
    %v2082 = vunpack.c.h.b16 %v1884
    %v2083 = vunpack.c.l.b16 %v1885
    %v2084 = vunpack.c.h.b16 %v1885
    %v2085 = vunpack.c.l.b16 %v1886
    %v2086 = vunpack.c.h.b16 %v1886
    %v2087 = vunpack.c.l.b16 %v1887
    %v2088 = vunpack.c.h.b16 %v1887
    %v2089 = vunpack.c.l.b16 %v1888
    %v2090 = vunpack.c.h.b16 %v1888
    %v2091 = vunpack.c.l.b16 %v1889
    %v2092 = vunpack.c.h.b16 %v1889
    %v2093 = vunpack.c.l.b16 %v1890
    %v2094 = vunpack.c.h.b16 %v1890
    %v2095 = vpack.c.b16 %v1969, %v1967
    %v2096 = vpack.c.b16 %v1970, %v1968
    %v2097 = vpack.c.b16 %v1973, %v1971
    %v2098 = vpack.c.b16 %v1974, %v1972
    %v2099 = vpack.c.b16 %v1977, %v1975
    %v2100 = vpack.c.b16 %v1978, %v1976
    %v2101 = vpack.c.b16 %v1981, %v1979
    %v2102 = vpack.c.b16 %v1982, %v1980
    %v2103 = vpack.c.b16 %v1985, %v1983
    %v2104 = vpack.c.b16 %v1986, %v1984
    %v2105 = vpack.c.b16 %v1989, %v1987
    %v2106 = vpack.c.b16 %v1990, %v1988
    %v2107 = vpack.c.b16 %v1993, %v1991
    %v2108 = vpack.c.b16 %v1994, %v1992
    %v2109 = vpack.c.b16 %v1997, %v1995
    %v2110 = vpack.c.b16 %v1998, %v1996
    %v2111 = vpack.c.b16 %v2001, %v1999
    %v2112 = vpack.c.b16 %v2002, %v2000
    %v2113 = vpack.c.b16 %v2005, %v2003
    %v2114 = vpack.c.b16 %v2006, %v2004
    %v2115 = vpack.c.b16 %v2009, %v2007
    %v2116 = vpack.c.b16 %v2010, %v2008
    %v2117 = vpack.c.b16 %v2013, %v2011
    %v2118 = vpack.c.b16 %v2014, %v2012
    %v2119 = vpack.c.b16 %v2017, %v2015
    %v2120 = vpack.c.b16 %v2018, %v2016
    %v2121 = vpack.c.b16 %v2021, %v2019
    %v2122 = vpack.c.b16 %v2022, %v2020
    %v2123 = vpack.c.b16 %v2025, %v2023
    %v2124 = vpack.c.b16 %v2026, %v2024
    %v2125 = vpack.c.b16 %v2029, %v2027
    %v2126 = vpack.c.b16 %v2030, %v2028
    %v2127 = vpack.c.b16 %v2033, %v2031
    %v2128 = vpack.c.b16 %v2034, %v2032
    %v2129 = vpack.c.b16 %v2037, %v2035
    %v2130 = vpack.c.b16 %v2038, %v2036
    %v2131 = vpack.c.b16 %v2041, %v2039
    %v2132 = vpack.c.b16 %v2042, %v2040
    %v2133 = vpack.c.b16 %v2045, %v2043
    %v2134 = vpack.c.b16 %v2046, %v2044
    %v2135 = vpack.c.b16 %v2049, %v2047
    %v2136 = vpack.c.b16 %v2050, %v2048
    %v2137 = vpack.c.b16 %v2053, %v2051
    %v2138 = vpack.c.b16 %v2054, %v2052
    %v2139 = vpack.c.b16 %v2057, %v2055
    %v2140 = vpack.c.b16 %v2058, %v2056
    %v2141 = vpack.c.b16 %v2061, %v2059
    %v2142 = vpack.c.b16 %v2062, %v2060
    %v2143 = vpack.c.b16 %v2065, %v2063
    %v2144 = vpack.c.b16 %v2066, %v2064
    %v2145 = vpack.c.b16 %v2069, %v2067
    %v2146 = vpack.c.b16 %v2070, %v2068
    %v2147 = vpack.c.b16 %v2073, %v2071
    %v2148 = vpack.c.b16 %v2074, %v2072
    %v2149 = vpack.c.b16 %v2077, %v2075
    %v2150 = vpack.c.b16 %v2078, %v2076
    %v2151 = vpack.c.b16 %v2081, %v2079
    %v2152 = vpack.c.b16 %v2082, %v2080
    %v2153 = vpack.c.b16 %v2085, %v2083
    %v2154 = vpack.c.b16 %v2086, %v2084
    %v2155 = vpack.c.b16 %v2089, %v2087
    %v2156 = vpack.c.b16 %v2090, %v2088
    %v2157 = vpack.c.b16 %v2093, %v2091
    %v2158 = vpack.c.b16 %v2094, %v2092
    %2223 = vmatprep.subr.bf16.mxu0 %v2110
    %2224 = vmatpush1.bf16.msra.mxu0 %v2109
    %2225 = vmatprep.subr.bf16.mxu0 %v2108
    %2226 = vmatpush1.bf16.msra.mxu0 %v2107
    %2227 = vmatprep.subr.bf16.mxu0 %v2106
    %2228 = vmatpush1.bf16.msra.mxu0 %v2105
    %2229 = vmatprep.subr.bf16.mxu0 %v2104
    %2230 = vmatpush1.bf16.msra.mxu0 %v2103
    %2231 = vmatprep.subr.bf16.mxu0 %v2102
    %2232 = vmatpush1.bf16.msra.mxu0 %v2101
    %2233 = vmatprep.subr.bf16.mxu0 %v2100
    %2234 = vmatpush1.bf16.msra.mxu0 %v2099
    %2235 = vmatprep.subr.bf16.mxu0 %v2098
    %2236 = vmatpush1.bf16.msra.mxu0 %v2097
    %2237 = vmatprep.subr.bf16.mxu0 %v2096
    %2238 = vmatpush1.bf16.msra.mxu0 %v2095
    %2239 = vmatprep.subr.bf16.mxu0 %v2126
    %2240 = vmatpush2.bf16.msra.mxu0 %v2125
    %2241 = vmatprep.subr.bf16.mxu0 %v2124
    %2242 = vmatpush2.bf16.msra.mxu0 %v2123
    %2243 = vmatprep.subr.bf16.mxu0 %v2122
    %2244 = vmatpush2.bf16.msra.mxu0 %v2121
    %2245 = vmatprep.subr.bf16.mxu0 %v2120
    %2246 = vmatpush2.bf16.msra.mxu0 %v2119
    %2247 = vmatprep.subr.bf16.mxu0 %v2118
    %2248 = vmatpush2.bf16.msra.mxu0 %v2117
    %2249 = vmatprep.subr.bf16.mxu0 %v2116
    %2250 = vmatpush2.bf16.msra.mxu0 %v2115
    %2251 = vmatprep.subr.bf16.mxu0 %v2114
    %2252 = vmatpush2.bf16.msra.mxu0 %v2113
    %2253 = vmatprep.subr.bf16.mxu0 %v2112
    %2254 = vmatpush2.bf16.msra.mxu0 %v2111
    %2255 = vmatprep.mubr.bf16.mxu0 %v1824
    %2256 = vmatmul.mubr.bf16.gmra.mxu0 %v1823
    %v2257 = vpop.f32.mrf.mxu0
    %v2258 = vadd.f32 %v1896, %v2257
    %v2259 = vpop.f32.mrf.mxu0
    %v2260 = vadd.f32 %v1900, %v2259
    %v2261 = vpop.f32.mrf.mxu0
    %v2262 = vadd.f32 %v1896, %v2261
    %v2263 = vpop.f32.mrf.mxu0
    %v2264 = vadd.f32 %v1900, %v2263
    %2265 = vdwg.mxu0
    %2266 = vmatprep.subr.bf16.mxu0 %v2142
    %2267 = vmatpush1.bf16.msra.mxu0 %v2141
    %2268 = vmatprep.subr.bf16.mxu0 %v2140
    %2269 = vmatpush1.bf16.msra.mxu0 %v2139
    %2270 = vmatprep.subr.bf16.mxu0 %v2138
    %2271 = vmatpush1.bf16.msra.mxu0 %v2137
    %2272 = vmatprep.subr.bf16.mxu0 %v2136
    %2273 = vmatpush1.bf16.msra.mxu0 %v2135
    %2274 = vmatprep.subr.bf16.mxu0 %v2134
    %2275 = vmatpush1.bf16.msra.mxu0 %v2133
    %2276 = vmatprep.subr.bf16.mxu0 %v2132
    %2277 = vmatpush1.bf16.msra.mxu0 %v2131
    %2278 = vmatprep.subr.bf16.mxu0 %v2130
    %2279 = vmatpush1.bf16.msra.mxu0 %v2129
    %2280 = vmatprep.subr.bf16.mxu0 %v2128
    %2281 = vmatpush1.bf16.msra.mxu0 %v2127
    %2282 = vmatprep.subr.bf16.mxu0 %v2158
    %2283 = vmatpush2.bf16.msra.mxu0 %v2157
    %2284 = vmatprep.subr.bf16.mxu0 %v2156
    %2285 = vmatpush2.bf16.msra.mxu0 %v2155
    %2286 = vmatprep.subr.bf16.mxu0 %v2154
    %2287 = vmatpush2.bf16.msra.mxu0 %v2153
    %2288 = vmatprep.subr.bf16.mxu0 %v2152
    %2289 = vmatpush2.bf16.msra.mxu0 %v2151
    %2290 = vmatprep.subr.bf16.mxu0 %v2150
    %2291 = vmatpush2.bf16.msra.mxu0 %v2149
    %2292 = vmatprep.subr.bf16.mxu0 %v2148
    %2293 = vmatpush2.bf16.msra.mxu0 %v2147
    %2294 = vmatprep.subr.bf16.mxu0 %v2146
    %2295 = vmatpush2.bf16.msra.mxu0 %v2145
    %2296 = vmatprep.subr.bf16.mxu0 %v2144
    %2297 = vmatpush2.bf16.msra.mxu0 %v2143
    %2298 = vmatprep.mubr.bf16.mxu0 %v1826
    %2299 = vmatmul.mubr.bf16.gmra.mxu0 %v1825
    %v2300 = vpop.f32.mrf.mxu0
    %v2301 = vadd.f32 %v2258, %v2300
    %v2302 = vpop.f32.mrf.mxu0
    %v2303 = vadd.f32 %v2260, %v2302
    %v2304 = vpop.f32.mrf.mxu0
    %v2305 = vadd.f32 %v2262, %v2304
    %v2306 = vpop.f32.mrf.mxu0
    %v2307 = vadd.f32 %v2264, %v2306
    %2308 = vdwg.mxu0
    %v2309 = vmax.f32 %v2301, 0.0
    %v2310 = vmax.f32 %v2303, 0.0
    %v2311 = vmax.f32 %v2305, 0.0
    %v2312 = vmax.f32 %v2307, 0.0
    %v2313 = vpack.c.bf16 %v2311, %v2309
    %v2314 = vpack.c.bf16 %v2312, %v2310
    %v2315 = vld [vmem:[#allocation4] sm:$0xf]
    %v2316 = vld [vmem:[#allocation4 + $0x4] sm:$0xf]
    %v2317 = vld [vmem:[#allocation4 + $0x8] sm:$0xf]
    %v2318 = vld [vmem:[#allocation4 + $0xc] sm:$0xf]
    %v2319 = vld [vmem:[#allocation4 + $0x10] sm:$0xf]
    %v2320 = vld [vmem:[#allocation4 + $0x14] sm:$0xf]
    %v2321 = vld [vmem:[#allocation4 + $0x18] sm:$0xf]
    %v2322 = vld [vmem:[#allocation4 + $0x1c] sm:$0xf]
    %v2323 = vld [vmem:[#allocation4 + $0x20] sm:$0xf]
    %v2324 = vld [vmem:[#allocation4 + $0x24] sm:$0xf]
    %v2325 = vld [vmem:[#allocation4 + $0x28] sm:$0xf]
    %v2326 = vld [vmem:[#allocation4 + $0x2c] sm:$0xf]
    %v2327 = vld [vmem:[#allocation4 + $0x30] sm:$0xf]
    %v2328 = vld [vmem:[#allocation4 + $0x34] sm:$0xf]
    %v2329 = vld [vmem:[#allocation4 + $0x38] sm:$0xf]
    %v2330 = vld [vmem:[#allocation4 + $0x3c] sm:$0xf]
    %v2331 = vld [vmem:[#allocation4 + $0x40] sm:$0xf]
    %v2332 = vld [vmem:[#allocation4 + $0x44] sm:$0xf]
    %v2333 = vld [vmem:[#allocation4 + $0x48] sm:$0xf]
    %v2334 = vld [vmem:[#allocation4 + $0x4c] sm:$0xf]
    %v2335 = vld [vmem:[#allocation4 + $0x50] sm:$0xf]
    %v2336 = vld [vmem:[#allocation4 + $0x54] sm:$0xf]
    %v2337 = vld [vmem:[#allocation4 + $0x58] sm:$0xf]
    %v2338 = vld [vmem:[#allocation4 + $0x5c] sm:$0xf]
    %v2339 = vld [vmem:[#allocation4 + $0x60] sm:$0xf]
    %v2340 = vld [vmem:[#allocation4 + $0x64] sm:$0xf]
    %v2341 = vld [vmem:[#allocation4 + $0x68] sm:$0xf]
    %v2342 = vld [vmem:[#allocation4 + $0x6c] sm:$0xf]
    %v2343 = vld [vmem:[#allocation4 + $0x70] sm:$0xf]
    %v2344 = vld [vmem:[#allocation4 + $0x74] sm:$0xf]
    %v2345 = vld [vmem:[#allocation4 + $0x78] sm:$0xf]
    %v2346 = vld [vmem:[#allocation4 + $0x7c] sm:$0xf]
    %v2347 = vld [vmem:[%s6] sm:$0x1]
    %v2349 = vlaneseq
    %v2350 = vshrl.u32 %v2349, 7
    %v2351 = vsub.s32 0, %v2350
    %v2352 = vrot.slane %v2347, %v2351
    %v2386 = vunpack.c.l.b16 %v2315
    %v2387 = vunpack.c.l.b16 %v2316
    %v2388 = vunpack.c.l.b16 %v2317
    %v2389 = vunpack.c.l.b16 %v2318
    %v2390 = vunpack.c.l.b16 %v2319
    %v2391 = vunpack.c.l.b16 %v2320
    %v2392 = vunpack.c.l.b16 %v2321
    %v2393 = vunpack.c.l.b16 %v2322
    %v2394 = vunpack.c.l.b16 %v2323
    %v2395 = vunpack.c.l.b16 %v2324
    %v2396 = vunpack.c.l.b16 %v2325
    %v2397 = vunpack.c.l.b16 %v2326
    %v2398 = vunpack.c.l.b16 %v2327
    %v2399 = vunpack.c.l.b16 %v2328
    %v2400 = vunpack.c.l.b16 %v2329
    %v2401 = vunpack.c.l.b16 %v2330
    %v2402 = vunpack.c.l.b16 %v2331
    %v2403 = vunpack.c.l.b16 %v2332
    %v2404 = vunpack.c.l.b16 %v2333
    %v2405 = vunpack.c.l.b16 %v2334
    %v2406 = vunpack.c.l.b16 %v2335
    %v2407 = vunpack.c.l.b16 %v2336
    %v2408 = vunpack.c.l.b16 %v2337
    %v2409 = vunpack.c.l.b16 %v2338
    %v2410 = vunpack.c.l.b16 %v2339
    %v2411 = vunpack.c.l.b16 %v2340
    %v2412 = vunpack.c.l.b16 %v2341
    %v2413 = vunpack.c.l.b16 %v2342
    %v2414 = vunpack.c.l.b16 %v2343
    %v2415 = vunpack.c.l.b16 %v2344
    %v2416 = vunpack.c.l.b16 %v2345
    %v2417 = vunpack.c.l.b16 %v2346
    %v2418 = vpack.c.b16 %v2387, %v2386
    %v2419 = vpack.c.b16 %v2389, %v2388
    %v2420 = vpack.c.b16 %v2391, %v2390
    %v2421 = vpack.c.b16 %v2393, %v2392
    %v2422 = vpack.c.b16 %v2395, %v2394
    %v2423 = vpack.c.b16 %v2397, %v2396
    %v2424 = vpack.c.b16 %v2399, %v2398
    %v2425 = vpack.c.b16 %v2401, %v2400
    %v2426 = vpack.c.b16 %v2403, %v2402
    %v2427 = vpack.c.b16 %v2405, %v2404
    %v2428 = vpack.c.b16 %v2407, %v2406
    %v2429 = vpack.c.b16 %v2409, %v2408
    %v2430 = vpack.c.b16 %v2411, %v2410
    %v2431 = vpack.c.b16 %v2413, %v2412
    %v2432 = vpack.c.b16 %v2415, %v2414
    %v2433 = vpack.c.b16 %v2417, %v2416
    %2450 = vmatprep.subr.bf16.mxu0 0
    %2451 = vmatpush1.bf16.msra.mxu0 %v2425
    %2452 = vmatprep.subr.bf16.mxu0 0
    %2453 = vmatpush1.bf16.msra.mxu0 %v2424
    %2454 = vmatprep.subr.bf16.mxu0 0
    %2455 = vmatpush1.bf16.msra.mxu0 %v2423
    %2456 = vmatprep.subr.bf16.mxu0 0
    %2457 = vmatpush1.bf16.msra.mxu0 %v2422
    %2458 = vmatprep.subr.bf16.mxu0 0
    %2459 = vmatpush1.bf16.msra.mxu0 %v2421
    %2460 = vmatprep.subr.bf16.mxu0 0
    %2461 = vmatpush1.bf16.msra.mxu0 %v2420
    %2462 = vmatprep.subr.bf16.mxu0 0
    %2463 = vmatpush1.bf16.msra.mxu0 %v2419
    %2464 = vmatprep.subr.bf16.mxu0 0
    %2465 = vmatpush1.bf16.msra.mxu0 %v2418
    %2466 = vmatprep.subr.bf16.mxu0 0
    %2467 = vmatpush2.bf16.msra.mxu0 %v2433
    %2468 = vmatprep.subr.bf16.mxu0 0
    %2469 = vmatpush2.bf16.msra.mxu0 %v2432
    %2470 = vmatprep.subr.bf16.mxu0 0
    %2471 = vmatpush2.bf16.msra.mxu0 %v2431
    %2472 = vmatprep.subr.bf16.mxu0 0
    %2473 = vmatpush2.bf16.msra.mxu0 %v2430
    %2474 = vmatprep.subr.bf16.mxu0 0
    %2475 = vmatpush2.bf16.msra.mxu0 %v2429
    %2476 = vmatprep.subr.bf16.mxu0 0
    %2477 = vmatpush2.bf16.msra.mxu0 %v2428
    %2478 = vmatprep.subr.bf16.mxu0 0
    %2479 = vmatpush2.bf16.msra.mxu0 %v2427
    %2480 = vmatprep.subr.bf16.mxu0 0
    %2481 = vmatpush2.bf16.msra.mxu0 %v2426
    %2482 = vmatprep.mubr.bf16.mxu0 %v2314
    %2483 = vmatmul.mubr.bf16.gmra.mxu0 %v2313
    %v2484 = vpop.f32.mrf.mxu0
    %v2485 = vadd.f32 %v2352, %v2484
    %v2486 = vpop.f32.mrf.mxu0
    %v2487 = vpop.f32.mrf.mxu0
    %v2488 = vadd.f32 %v2352, %v2487
    %v2489 = vpop.f32.mrf.mxu0
    %2490 = vdwg.mxu0
    %v2491 = vmax.f32 %v2485, 0.0
    %v2492 = vmax.f32 %v2488, 0.0
    %v2493 = vpack.c.bf16 %v2492, %v2491
    %v2494 = vld [vmem:[%s7] sm:$0xf]
    %v2495 = vld [vmem:[%s7 + $0x4] sm:$0xf]
    %v2496 = vld [vmem:[%s7 + $0x8] sm:$0xf]
    %v2497 = vld [vmem:[%s7 + $0xc] sm:$0xf]
    %v2498 = vld [vmem:[%s7 + $0x10] sm:$0xf]
    %v2499 = vld [vmem:[%s7 + $0x14] sm:$0xf]
    %v2500 = vld [vmem:[%s7 + $0x18] sm:$0xf]
    %v2501 = vld [vmem:[%s7 + $0x1c] sm:$0xf]
    %v2502 = vld [vmem:[%s7 + $0x20] sm:$0xf]
    %v2503 = vld [vmem:[%s7 + $0x24] sm:$0xf]
    %v2504 = vld [vmem:[%s7 + $0x28] sm:$0xf]
    %v2505 = vld [vmem:[%s7 + $0x2c] sm:$0xf]
    %v2506 = vld [vmem:[%s7 + $0x30] sm:$0xf]
    %v2507 = vld [vmem:[%s7 + $0x34] sm:$0xf]
    %v2508 = vld [vmem:[%s7 + $0x38] sm:$0xf]
    %v2509 = vld [vmem:[%s7 + $0x3c] sm:$0xf]
    %v2510 = vld [vmem:[%s8] sm:$0x1]
    %v2512 = vlaneseq
    %v2513 = vshrl.u32 %v2512, 7
    %v2514 = vsub.s32 0, %v2513
    %v2515 = vrot.slane %v2510, %v2514
    %v2533 = vunpack.c.l.b16 %v2494
    %v2534 = vunpack.c.l.b16 %v2495
    %v2535 = vunpack.c.l.b16 %v2496
    %v2536 = vunpack.c.l.b16 %v2497
    %v2537 = vunpack.c.l.b16 %v2498
    %v2538 = vunpack.c.l.b16 %v2499
    %v2539 = vunpack.c.l.b16 %v2500
    %v2540 = vunpack.c.l.b16 %v2501
    %v2541 = vunpack.c.l.b16 %v2502
    %v2542 = vunpack.c.l.b16 %v2503
    %v2543 = vunpack.c.l.b16 %v2504
    %v2544 = vunpack.c.l.b16 %v2505
    %v2545 = vunpack.c.l.b16 %v2506
    %v2546 = vunpack.c.l.b16 %v2507
    %v2547 = vunpack.c.l.b16 %v2508
    %v2548 = vunpack.c.l.b16 %v2509
    %v2549 = vpack.c.b16 %v2534, %v2533
    %v2550 = vpack.c.b16 %v2536, %v2535
    %v2551 = vpack.c.b16 %v2538, %v2537
    %v2552 = vpack.c.b16 %v2540, %v2539
    %v2553 = vpack.c.b16 %v2542, %v2541
    %v2554 = vpack.c.b16 %v2544, %v2543
    %v2555 = vpack.c.b16 %v2546, %v2545
    %v2556 = vpack.c.b16 %v2548, %v2547
    %2565 = vmatprep.subr.bf16.mxu0 0
    %2566 = vmatpush1.bf16.msra.mxu0 %v2556
    %2567 = vmatprep.subr.bf16.mxu0 0
    %2568 = vmatpush1.bf16.msra.mxu0 %v2555
    %2569 = vmatprep.subr.bf16.mxu0 0
    %2570 = vmatpush1.bf16.msra.mxu0 %v2554
    %2571 = vmatprep.subr.bf16.mxu0 0
    %2572 = vmatpush1.bf16.msra.mxu0 %v2553
    %2573 = vmatprep.subr.bf16.mxu0 0
    %2574 = vmatpush1.bf16.msra.mxu0 %v2552
    %2575 = vmatprep.subr.bf16.mxu0 0
    %2576 = vmatpush1.bf16.msra.mxu0 %v2551
    %2577 = vmatprep.subr.bf16.mxu0 0
    %2578 = vmatpush1.bf16.msra.mxu0 %v2550
    %2579 = vmatprep.subr.bf16.mxu0 0
    %2580 = vmatpush1.bf16.msra.mxu0 %v2549
    %2581 = vmatprep.subr.bf16.mxu0 0
    %2582 = vmatpush2.bf16.msra.mxu0 0
    %2583 = vmatprep.subr.bf16.mxu0 0
    %2584 = vmatpush2.bf16.msra.mxu0 0
    %2585 = vmatprep.subr.bf16.mxu0 0
    %2586 = vmatpush2.bf16.msra.mxu0 0
    %2587 = vmatprep.subr.bf16.mxu0 0
    %2588 = vmatpush2.bf16.msra.mxu0 0
    %2589 = vmatprep.subr.bf16.mxu0 0
    %2590 = vmatpush2.bf16.msra.mxu0 0
    %2591 = vmatprep.subr.bf16.mxu0 0
    %2592 = vmatpush2.bf16.msra.mxu0 0
    %2593 = vmatprep.subr.bf16.mxu0 0
    %2594 = vmatpush2.bf16.msra.mxu0 0
    %2595 = vmatprep.subr.bf16.mxu0 0
    %2596 = vmatpush2.bf16.msra.mxu0 0
    %2597 = vmatprep.mubr.bf16.mxu0 0
    %2598 = vmatmul.mubr.bf16.gmra.mxu0 %v2493
    %v2599 = vpop.f32.mrf.mxu0
    %v2600 = vadd.f32 %v2515, %v2599
    %v2601 = vpop.f32.mrf.mxu0
    %v2602 = vpop.f32.mrf.mxu0
    %v2603 = vadd.f32 %v2515, %v2602
    %v2604 = vpop.f32.mrf.mxu0
    %2605 = vdwg.mxu0
    %2606 = vst [vmem:[%s9] sm:$0xff] %v2600
    %2607 = vst [vmem:[%s9 + $0x8] sm:$0xff] %v2603
    // Predicated region
    $region46: #{simple_net_forward.1} parent=1 // pred_check
      _
    $region47: #{simple_net_forward.1} parent=1 // pred_check_branch
      %2609 = sbr.rel (0) target = $region49
    $region48: #{simple_net_forward.1} parent=1 // pred_region
      _
    $region49: #{simple_net_forward.1} parent=1 // pred_fallthru
      _
    // Predicated region
    $region50: #{simple_net_forward.1} parent=1 // pred_check
      _
    $region51: #{simple_net_forward.1} parent=1 // pred_check_branch
      %2611 = sbr.rel (0) target = $region53
    $region52: #{simple_net_forward.1} parent=1 // pred_region
      _
    $region53: #{simple_net_forward.1} parent=1 // pred_fallthru
      _
    %2612 = vsyncpa [#allocation3], 1
    %2613 = vsyncpa [#allocation5], 1

</llo_original>
